<compile_context>
chip_gen: v6e
topology: v6e:2x2x1
jax: 0.10.0
libtpu: 0.0.40
codegen_flags: <defaults>
</compile_context>

<pallas_src>
import functools

import jax
import jax.numpy as jnp
from jax.experimental import pallas as pl
from jax.experimental.pallas import tpu as pltpu

_LANE = 128
_SUBLANE = 8


def _round_up(n, m):
    return ((n + m - 1) // m) * m


def _cdiv(a, b):
    return -(-a // b)


def _autoencoder_kernel(
    x_ref,
    w1_ref, w2_ref, w34_ref, w5_ref, w6_ref,
    bias_ref,   # (8,128) f32: row0=b1(128), row1=b2(64), row2=b34(64), row3=b5(128)
    b6_ref,     # (1, D_pad) f32
    out_ref,
):
    """Whole (fused) autoencoder forward for one batch tile.

    Straight-line (no loop over layers) so the LLO scheduler can interleave each
    layer's MXU pushes with the neighbouring layers' VPU bias/ReLU work.
    """
    cdt = w1_ref.dtype  # matmul operand dtype (bf16 by default, f32 when use_bf16=False)

    # Static slices of the packed bias buffer (zero runtime cost).
    b1 = bias_ref[0:1, :]        # (1, 128)
    b2 = bias_ref[1:2, :64]      # (1, 64)
    b34 = bias_ref[2:3, :64]     # (1, 64)
    b5 = bias_ref[3:4, :]        # (1, 128)

    h = x_ref[...]

    # ---- encoder L1/L2 ----
    h = jnp.dot(h, w1_ref[...], preferred_element_type=jnp.float32) + b1
    h = jnp.maximum(h, 0.0).astype(cdt)
    h = jnp.dot(h, w2_ref[...], preferred_element_type=jnp.float32) + b2
    h = jnp.maximum(h, 0.0).astype(cdt)

    # ---- fused encoder L3 + decoder L1 (no activation between them in the module) ----
    h = jnp.dot(h, w34_ref[...], preferred_element_type=jnp.float32) + b34
    h = jnp.maximum(h, 0.0).astype(cdt)

    # ---- decoder L2/L3 ----
    h = jnp.dot(h, w5_ref[...], preferred_element_type=jnp.float32) + b5
    h = jnp.maximum(h, 0.0).astype(cdt)
    h = jnp.dot(h, w6_ref[...], preferred_element_type=jnp.float32) + b6_ref[...]

    # Numerically stable sigmoid: sigmoid(x) = 0.5*tanh(x/2) + 0.5.
    # tanh runs on the otherwise-idle EUP slot and avoids exp(-x)=inf edge cases.
    out_ref[...] = (0.5 * jnp.tanh(0.5 * h) + 0.5).astype(out_ref.dtype)


def autoencoder_forward(x, params, *, batch_tile=512, use_bf16=True):
    """x: (B, D) float32; params: dict of transposed weights (in,out) and biases (1,out)."""
    B, D = x.shape
    out_dtype = x.dtype
    comp_dtype = jnp.bfloat16 if use_bf16 else x.dtype

    # Lane-dense feature dim: pad D up to a multiple of 128 so stores are unmasked vst.
    D_pad = _round_up(max(D, _LANE), _LANE)

    # --- batch tile selection: minimize padding, keep >= 2 tiles for v7x's 2 TCs ---
    row_align = 16 if use_bf16 else _SUBLANE  # bf16 packs 2 rows per sublane
    n_tiles = max(1, _cdiv(B, batch_tile))
    if B >= 2 * row_align:
        n_tiles = max(n_tiles, 2)
    eff_tile = _round_up(_cdiv(B, n_tiles), row_align)

    # --- VMEM-aware cap: double-buffered x/out tiles + params must fit the budget ---
    in_isz = jnp.dtype(comp_dtype).itemsize
    out_isz = jnp.dtype(out_dtype).itemsize

    def est_vmem_bytes(tile):
        x_io = 2 * tile * D_pad * (in_isz + out_isz)          # x + out, double-buffered
        big_params = 2 * 2 * D_pad * 128 * in_isz             # w1 & w6, double-buffered
        small_params = 2 * ((128 * 64 + 64 * 64 + 64 * 128) * in_isz
                            + (8 * 128 + D_pad) * 4)          # w2/w34/w5 + biases
        work = tile * 128 * 4 * 4                              # intermediate activations
        return x_io + big_params + small_params + work

    _TILE_BUDGET = 28 * 1024 * 1024  # safe on v5e/v6e/v7x once vmem_limit is raised
    while eff_tile > row_align and est_vmem_bytes(eff_tile) > _TILE_BUDGET:
        eff_tile = max(row_align, _round_up(eff_tile // 2, row_align))

    B_pad = _round_up(B, eff_tile)
    grid = (B_pad // eff_tile,)

    vmem_limit = int(min(48 << 20, max(est_vmem_bytes(eff_tile) * 5 // 4, 16 << 20)))

    # --- parameter prep (all in the wrapper, once per call) ---
    w1, b1 = params["w1"], params["b1"]
    w2, b2 = params["w2"], params["b2"]
    w3, b3 = params["w3"], params["b3"]
    w4, b4 = params["w4"], params["b4"]
    w5, b5 = params["w5"], params["b5"]
    w6, b6 = params["w6"], params["b6"]

    hp = functools.partial(jnp.dot, precision=jax.lax.Precision.HIGHEST)
    # Fuse encoder L3 + decoder L1: (x@w3+b3)@w4+b4 == x@(w3@w4) + (b3@w4+b4).
    w34 = hp(w3, w4)                      # (64, 64) f32
    b34 = hp(b3, w4) + b4                 # (1, 64)  f32

    xp = x
    if D_pad != D or B_pad != B:
        xp = jnp.pad(xp, ((0, B_pad - B), (0, D_pad - D)))
    if D_pad != D:
        # Zero padding keeps the math identical; padded output cols are sliced off below.
        w1 = jnp.pad(w1, ((0, D_pad - D), (0, 0)))
        w6 = jnp.pad(w6, ((0, 0), (0, D_pad - D)))
        b6 = jnp.pad(b6, ((0, 0), (0, D_pad - D)))

    # Pack the five small biases into one lane-aligned f32 buffer (one operand, one DMA).
    bias_pack = jnp.zeros((8, 128), jnp.float32)
    bias_pack = bias_pack.at[0, :128].set(b1[0].astype(jnp.float32))
    bias_pack = bias_pack.at[1, :64].set(b2[0].astype(jnp.float32))
    bias_pack = bias_pack.at[2, :64].set(b34[0].astype(jnp.float32))
    bias_pack = bias_pack.at[3, :128].set(b5[0].astype(jnp.float32))
    b6 = b6.astype(jnp.float32)

    # MXU operands in bf16 by default (f32 accumulation & f32 biases).
    if use_bf16:
        xp = xp.astype(jnp.bfloat16)
        w1, w2, w34, w5, w6 = (w.astype(jnp.bfloat16) for w in (w1, w2, w34, w5, w6))

    def param_spec(shape):
        # Whole parameter, same block every step -> DMA'd once, never re-fetched.
        return pl.BlockSpec(shape, lambda i: (0, 0))

    layer_dims = [(D_pad, 128), (128, 64), (64, 64), (64, 128), (128, D_pad)]
    flops = 2 * B_pad * sum(fi * fo for fi, fo in layer_dims)
    param_bytes = sum(
        int(a.size) * a.dtype.itemsize
        for a in (w1, w2, w34, w5, w6, bias_pack, b6)
    )
    bytes_accessed = (
        int(xp.size) * xp.dtype.itemsize
        + B_pad * D_pad * jnp.dtype(out_dtype).itemsize
        + param_bytes
    )

    out = pl.pallas_call(
        _autoencoder_kernel,
        out_shape=jax.ShapeDtypeStruct((B_pad, D_pad), out_dtype),
        grid_spec=pltpu.PrefetchScalarGridSpec(
            num_scalar_prefetch=0,
            grid=grid,
            in_specs=[
                pl.BlockSpec((eff_tile, D_pad), lambda i: (i, 0)),  # x tile
                param_spec(w1.shape),
                param_spec(w2.shape),
                param_spec(w34.shape),
                param_spec(w5.shape),
                param_spec(w6.shape),
                param_spec(bias_pack.shape),
                param_spec(b6.shape),
            ],
            out_specs=pl.BlockSpec((eff_tile, D_pad), lambda i: (i, 0)),
        ),
        compiler_params=pltpu.CompilerParams(
            # Batch tiles are independent; grid has >=2 tiles whenever B allows so the
            # second TensorCore on v7x is not idle.
            dimension_semantics=("parallel",),
            vmem_limit_bytes=vmem_limit,
        ),
        cost_estimate=pl.CostEstimate(
            flops=int(flops),
            transcendentals=int(B_pad * D_pad),
            bytes_accessed=int(bytes_accessed),
        ),
    )(xp, w1, w2, w34, w5, w6, bias_pack, b6)

    return out[:B, :D]


def init_params(key, input_dim):
    """Deterministic init matching PyTorch Linear shapes.

    PyTorch stores weight as (out, in); we store the transpose (in, out) so the
    kernel computes y = x @ W + b.  Biases are kept 2-D (1, out) for TPU layout.
    """
    layer_dims = [
        (input_dim, 128),  # encoder L1
        (128, 64),         # encoder L2
        (64, 16),          # encoder L3
        (16, 64),          # decoder L1
        (64, 128),         # decoder L2
        (128, input_dim),  # decoder L3
    ]
    params = {}
    for idx, (fan_in, fan_out) in enumerate(layer_dims, start=1):
        key, kw, kb = jax.random.split(key, 3)
        bound = 1.0 / jnp.sqrt(fan_in)  # PyTorch default uniform(-1/sqrt(in), 1/sqrt(in))
        params[f"w{idx}"] = jax.random.uniform(
            kw, (fan_in, fan_out), jnp.float32, -bound, bound
        )
        params[f"b{idx}"] = jax.random.uniform(
            kb, (1, fan_out), jnp.float32, -bound, bound
        )
    return params


def reference_forward(x, params):
    dot = functools.partial(jnp.dot, precision=jax.lax.Precision.HIGHEST)
    h = jnp.maximum(dot(x, params["w1"]) + params["b1"], 0.0)
    h = jnp.maximum(dot(h, params["w2"]) + params["b2"], 0.0)
    h = dot(h, params["w3"]) + params["b3"]
    h = jnp.maximum(dot(h, params["w4"]) + params["b4"], 0.0)
    h = jnp.maximum(dot(h, params["w5"]) + params["b5"], 0.0)
    h = dot(h, params["w6"]) + params["b6"]
    return jax.nn.sigmoid(h)


if __name__ == "__main__":
    key = jax.random.PRNGKey(0)
    key, kx = jax.random.split(key)

    batch = 600       # not a tile multiple -> exercises batch padding + >=2-tile grid
    input_dim = 48    # not lane-aligned    -> exercises feature padding

    x = jax.random.uniform(kx, (batch, input_dim), jnp.float32)
    params = init_params(key, input_dim)

    ref = reference_forward(x, params)

    # Default path: bf16 MXU operands, f32 accumulation (full MXU rate on v5e/v6e/v7x).
    fwd_bf16 = jax.jit(functools.partial(autoencoder_forward, batch_tile=512))
    out_bf16 = jax.block_until_ready(fwd_bf16(x, params))
    assert out_bf16.shape == (batch, input_dim)
    assert float(jnp.max(jnp.abs(out_bf16 - ref))) < 5e-2, "bf16 kernel mismatch vs JAX reference"

    # f32 MXU operand path (higher precision, ~3x MXU passes).
    fwd_f32 = jax.jit(functools.partial(autoencoder_forward, batch_tile=512, use_bf16=False))
    out_f32 = jax.block_until_ready(fwd_f32(x, params))
    assert out_f32.shape == (batch, input_dim)
    assert jnp.allclose(out_f32, ref, atol=1e-4, rtol=1e-4), "f32 kernel mismatch vs JAX reference"

    print("KERNEL_OK")
</pallas_src>

<mosaic_0001>
module attributes {stable_mosaic.version = 11 : i64} {
  func.func @_autoencoder_kernel(%arg0: i32, %arg1: memref<304x128xbf16, #tpu.memory_space<vmem>>, %arg2: memref<128x128xbf16, #tpu.memory_space<vmem>>, %arg3: memref<128x64xbf16, #tpu.memory_space<vmem>>, %arg4: memref<64x64xbf16, #tpu.memory_space<vmem>>, %arg5: memref<64x128xbf16, #tpu.memory_space<vmem>>, %arg6: memref<128x128xbf16, #tpu.memory_space<vmem>>, %arg7: memref<8x128xf32, #tpu.memory_space<vmem>>, %arg8: memref<1x128xf32, #tpu.memory_space<vmem>>, %arg9: memref<304x128xf32, #tpu.memory_space<vmem>>) attributes {dimension_semantics = [#tpu.dimension_semantics<parallel>], iteration_bounds = array<i64: 2>, scalar_prefetch = 0 : i64, scratch_operands = 0 : i64, tpu.core_type = #tpu.core_type<tc>, window_params = [{transform_indices = @transform_0, window_bounds = array<i64: 304, 128>}, {pipeline_mode = #tpu.pipeline_mode<synchronous>, transform_indices = @transform_1, window_bounds = array<i64: 128, 128>}, {pipeline_mode = #tpu.pipeline_mode<synchronous>, transform_indices = @transform_2, window_bounds = array<i64: 128, 64>}, {pipeline_mode = #tpu.pipeline_mode<synchronous>, transform_indices = @transform_3, window_bounds = array<i64: 64, 64>}, {pipeline_mode = #tpu.pipeline_mode<synchronous>, transform_indices = @transform_4, window_bounds = array<i64: 64, 128>}, {pipeline_mode = #tpu.pipeline_mode<synchronous>, transform_indices = @transform_5, window_bounds = array<i64: 128, 128>}, {pipeline_mode = #tpu.pipeline_mode<synchronous>, transform_indices = @transform_6, window_bounds = array<i64: 8, 128>}, {pipeline_mode = #tpu.pipeline_mode<synchronous>, transform_indices = @transform_7, window_bounds = array<i64: 1, 128>}, {transform_indices = @transform_8, window_bounds = array<i64: 304, 128>}]} {
    %c0 = arith.constant 0 : index
    %c0_0 = arith.constant 0 : index
    %0 = vector.load %arg7[%c0, %c0_0] : memref<8x128xf32, #tpu.memory_space<vmem>>, vector<1x128xf32>
    %c1 = arith.constant 1 : index
    %c0_1 = arith.constant 0 : index
    %1 = vector.load %arg7[%c1, %c0_1] : memref<8x128xf32, #tpu.memory_space<vmem>>, vector<1x64xf32>
    %c2 = arith.constant 2 : index
    %c0_2 = arith.constant 0 : index
    %2 = vector.load %arg7[%c2, %c0_2] : memref<8x128xf32, #tpu.memory_space<vmem>>, vector<1x64xf32>
    %c3 = arith.constant 3 : index
    %c0_3 = arith.constant 0 : index
    %3 = vector.load %arg7[%c3, %c0_3] : memref<8x128xf32, #tpu.memory_space<vmem>>, vector<1x128xf32>
    %c0_4 = arith.constant 0 : index
    %c0_5 = arith.constant 0 : index
    %4 = vector.load %arg1[%c0_4, %c0_5] : memref<304x128xbf16, #tpu.memory_space<vmem>>, vector<304x128xbf16>
    %c0_6 = arith.constant 0 : index
    %c0_7 = arith.constant 0 : index
    %5 = vector.load %arg2[%c0_6, %c0_7] : memref<128x128xbf16, #tpu.memory_space<vmem>>, vector<128x128xbf16>
    %cst = arith.constant dense<0.000000e+00> : vector<304x128xf32>
    %6 = tpu.matmul %4, %5, %cst {dimension_numbers = #tpu.dot_dimension_numbers<[1], [0], [0], [1], [0, 0, 1, 1], [], []>} : vector<304x128xbf16>, vector<128x128xbf16>, vector<304x128xf32> -> vector<304x128xf32>
    %7 = vector.broadcast %0 : vector<1x128xf32> to vector<304x128xf32>
    %8 = arith.addf %6, %7 : vector<304x128xf32>
    %cst_8 = arith.constant 0.000000e+00 : f32
    %9 = vector.broadcast %cst_8 : f32 to vector<304x128xf32>
    %10 = arith.maximumf %8, %9 : vector<304x128xf32>
    %11 = arith.truncf %10 : vector<304x128xf32> to vector<304x128xbf16>
    %c0_9 = arith.constant 0 : index
    %c0_10 = arith.constant 0 : index
    %12 = vector.load %arg3[%c0_9, %c0_10] : memref<128x64xbf16, #tpu.memory_space<vmem>>, vector<128x64xbf16>
    %cst_11 = arith.constant dense<0.000000e+00> : vector<304x64xf32>
    %13 = tpu.matmul %11, %12, %cst_11 {dimension_numbers = #tpu.dot_dimension_numbers<[1], [0], [0], [1], [0, 0, 1, 1], [], []>} : vector<304x128xbf16>, vector<128x64xbf16>, vector<304x64xf32> -> vector<304x64xf32>
    %14 = vector.broadcast %1 : vector<1x64xf32> to vector<304x64xf32>
    %15 = arith.addf %13, %14 : vector<304x64xf32>
    %cst_12 = arith.constant 0.000000e+00 : f32
    %16 = vector.broadcast %cst_12 : f32 to vector<304x64xf32>
    %17 = arith.maximumf %15, %16 : vector<304x64xf32>
    %18 = arith.truncf %17 : vector<304x64xf32> to vector<304x64xbf16>
    %c0_13 = arith.constant 0 : index
    %c0_14 = arith.constant 0 : index
    %19 = vector.load %arg4[%c0_13, %c0_14] : memref<64x64xbf16, #tpu.memory_space<vmem>>, vector<64x64xbf16>
    %cst_15 = arith.constant dense<0.000000e+00> : vector<304x64xf32>
    %20 = tpu.matmul %18, %19, %cst_15 {dimension_numbers = #tpu.dot_dimension_numbers<[1], [0], [0], [1], [0, 0, 1, 1], [], []>} : vector<304x64xbf16>, vector<64x64xbf16>, vector<304x64xf32> -> vector<304x64xf32>
    %21 = vector.broadcast %2 : vector<1x64xf32> to vector<304x64xf32>
    %22 = arith.addf %20, %21 : vector<304x64xf32>
    %cst_16 = arith.constant 0.000000e+00 : f32
    %23 = vector.broadcast %cst_16 : f32 to vector<304x64xf32>
    %24 = arith.maximumf %22, %23 : vector<304x64xf32>
    %25 = arith.truncf %24 : vector<304x64xf32> to vector<304x64xbf16>
    %c0_17 = arith.constant 0 : index
    %c0_18 = arith.constant 0 : index
    %26 = vector.load %arg5[%c0_17, %c0_18] : memref<64x128xbf16, #tpu.memory_space<vmem>>, vector<64x128xbf16>
    %cst_19 = arith.constant dense<0.000000e+00> : vector<304x128xf32>
    %27 = tpu.matmul %25, %26, %cst_19 {dimension_numbers = #tpu.dot_dimension_numbers<[1], [0], [0], [1], [0, 0, 1, 1], [], []>} : vector<304x64xbf16>, vector<64x128xbf16>, vector<304x128xf32> -> vector<304x128xf32>
    %28 = vector.broadcast %3 : vector<1x128xf32> to vector<304x128xf32>
    %29 = arith.addf %27, %28 : vector<304x128xf32>
    %cst_20 = arith.constant 0.000000e+00 : f32
    %30 = vector.broadcast %cst_20 : f32 to vector<304x128xf32>
    %31 = arith.maximumf %29, %30 : vector<304x128xf32>
    %32 = arith.truncf %31 : vector<304x128xf32> to vector<304x128xbf16>
    %c0_21 = arith.constant 0 : index
    %c0_22 = arith.constant 0 : index
    %33 = vector.load %arg6[%c0_21, %c0_22] : memref<128x128xbf16, #tpu.memory_space<vmem>>, vector<128x128xbf16>
    %cst_23 = arith.constant dense<0.000000e+00> : vector<304x128xf32>
    %34 = tpu.matmul %32, %33, %cst_23 {dimension_numbers = #tpu.dot_dimension_numbers<[1], [0], [0], [1], [0, 0, 1, 1], [], []>} : vector<304x128xbf16>, vector<128x128xbf16>, vector<304x128xf32> -> vector<304x128xf32>
    %c0_24 = arith.constant 0 : index
    %c0_25 = arith.constant 0 : index
    %35 = vector.load %arg8[%c0_24, %c0_25] : memref<1x128xf32, #tpu.memory_space<vmem>>, vector<1x128xf32>
    %36 = vector.broadcast %35 : vector<1x128xf32> to vector<304x128xf32>
    %37 = arith.addf %34, %36 : vector<304x128xf32>
    %cst_26 = arith.constant 5.000000e-01 : f32
    %38 = vector.broadcast %cst_26 : f32 to vector<304x128xf32>
    %39 = arith.mulf %38, %37 : vector<304x128xf32>
    %40 = math.tanh %39 : vector<304x128xf32>
    %cst_27 = arith.constant 5.000000e-01 : f32
    %41 = vector.broadcast %cst_27 : f32 to vector<304x128xf32>
    %42 = arith.mulf %41, %40 : vector<304x128xf32>
    %cst_28 = arith.constant 5.000000e-01 : f32
    %43 = vector.broadcast %cst_28 : f32 to vector<304x128xf32>
    %44 = arith.addf %42, %43 : vector<304x128xf32>
    %c0_29 = arith.constant 0 : index
    %c0_30 = arith.constant 0 : index
    %45 = vector.load %arg9[%c0_29, %c0_30] : memref<304x128xf32, #tpu.memory_space<vmem>>, vector<304x128xf32>
    tpu.vector_store %arg9[%c0_29, %c0_30], %44 {strides = array<i32>} : memref<304x128xf32, #tpu.memory_space<vmem>>, vector<304x128xf32>,
    return
  }
  func.func @transform_0(%arg0: i32) -> (i32, i32) {
    %c0_i32 = arith.constant 0 : i32
    %c0_i32_0 = arith.constant 0 : i32
    return %arg0, %c0_i32 : i32, i32
  }
  func.func @transform_1(%arg0: i32) -> (i32, i32) {
    %c0_i32 = arith.constant 0 : i32
    %c0_i32_0 = arith.constant 0 : i32
    %c0_i32_1 = arith.constant 0 : i32
    return %c0_i32, %c0_i32_0 : i32, i32
  }
  func.func @transform_2(%arg0: i32) -> (i32, i32) {
    %c0_i32 = arith.constant 0 : i32
    %c0_i32_0 = arith.constant 0 : i32
    %c0_i32_1 = arith.constant 0 : i32
    return %c0_i32, %c0_i32_0 : i32, i32
  }
  func.func @transform_3(%arg0: i32) -> (i32, i32) {
    %c0_i32 = arith.constant 0 : i32
    %c0_i32_0 = arith.constant 0 : i32
    %c0_i32_1 = arith.constant 0 : i32
    return %c0_i32, %c0_i32_0 : i32, i32
  }
  func.func @transform_4(%arg0: i32) -> (i32, i32) {
    %c0_i32 = arith.constant 0 : i32
    %c0_i32_0 = arith.constant 0 : i32
    %c0_i32_1 = arith.constant 0 : i32
    return %c0_i32, %c0_i32_0 : i32, i32
  }
  func.func @transform_5(%arg0: i32) -> (i32, i32) {
    %c0_i32 = arith.constant 0 : i32
    %c0_i32_0 = arith.constant 0 : i32
    %c0_i32_1 = arith.constant 0 : i32
    return %c0_i32, %c0_i32_0 : i32, i32
  }
  func.func @transform_6(%arg0: i32) -> (i32, i32) {
    %c0_i32 = arith.constant 0 : i32
    %c0_i32_0 = arith.constant 0 : i32
    %c0_i32_1 = arith.constant 0 : i32
    return %c0_i32, %c0_i32_0 : i32, i32
  }
  func.func @transform_7(%arg0: i32) -> (i32, i32) {
    %c0_i32 = arith.constant 0 : i32
    %c0_i32_0 = arith.constant 0 : i32
    %c0_i32_1 = arith.constant 0 : i32
    return %c0_i32, %c0_i32_0 : i32, i32
  }
  func.func @transform_8(%arg0: i32) -> (i32, i32) {
    %c0_i32 = arith.constant 0 : i32
    %c0_i32_0 = arith.constant 0 : i32
    return %arg0, %c0_i32 : i32, i32
  }
}

</mosaic_0001>

<llo_original>
// kernel: autoencoder_forward.1
$region0: #{autoencoder_forward.1}
  #allocation0 [shape = 'u32[]', space=smem, size = 0x4, offset = 0x4, fixed_abs, tag = 'smem constant byte address 0x4 - core index']
  #allocation1 [shape = 'u32[144,128]{1,0:T(1,128)}', space=vmem, size = 0x12000, scoped, tag = 'internal scratch']
  %s0 = inlined_call_operand.vmem [shape: bf16[608,128], index: 0, kind: input, shape index: {}]
  %s1 = inlined_call_operand.vmem [shape: bf16[128,128], index: 1, kind: input, shape index: {}]
  %s2 = inlined_call_operand.vmem [shape: bf16[128,64], index: 2, kind: input, shape index: {}]
  %s3 = inlined_call_operand.vmem [shape: bf16[64,64], index: 3, kind: input, shape index: {}]
  %s4 = inlined_call_operand.vmem [shape: bf16[64,128], index: 4, kind: input, shape index: {}]
  %s5 = inlined_call_operand.vmem [shape: bf16[128,128], index: 5, kind: input, shape index: {}]
  %s6 = inlined_call_operand.vmem [shape: f32[8,128], index: 6, kind: input, shape index: {}]
  %s7 = inlined_call_operand.vmem [shape: f32[1,128], index: 7, kind: input, shape index: {}]
  %s8 = inlined_call_operand.vmem [shape: f32[608,128], index: 8, kind: output, shape index: {}]
  %s9 = sld [smem:[#allocation0]]
  $region65: #{autoencoder_forward.1} parent=0
    _
  %s11 = ssub.s32 1, %s9
  %s12 = scalar_select 0, %s11, %s9
  loop: start=0, step=1, limit=4
  $region2: #{autoencoder_forward.1} parent=0 // loop_pre_header
    _
  $region3: #{autoencoder_forward.1} parent=0 // loop_header
    %s14 = sphi 0, %s18
    %p15 = scmp.ge.s32.totalorder %s14, 4
    %s24 = sphi 0, %s26
    %s27 = sphi 0, %s24
    %s28 = sphi 0, %s27
    %s44 = sphi 0, %s28
    %s48 = sphi 0, %s48
    %s50 = sphi 0, %s48
    %s51 = sphi 0, %s50
    %s65 = sphi 0, %s51
    %s69 = sphi 0, %s69
    %s71 = sphi 0, %s69
    %s72 = sphi 0, %s71
    %s86 = sphi 0, %s72
    %s90 = sphi 0, %s90
    %s92 = sphi 0, %s90
    %s93 = sphi 0, %s92
    %s107 = sphi 0, %s93
    %s111 = sphi 0, %s111
    %s113 = sphi 0, %s111
    %s114 = sphi 0, %s113
    %s128 = sphi 0, %s114
    %s132 = sphi 0, %s132
    %s134 = sphi 0, %s132
    %s135 = sphi 0, %s134
    %s149 = sphi 0, %s135
    %s153 = sphi 0, %s153
    %s155 = sphi 0, %s153
    %s156 = sphi 0, %s155
    %s170 = sphi 0, %s156
    %s174 = sphi 0, %s174
    %s176 = sphi 0, %s174
    %s177 = sphi 0, %s176
    %s191 = sphi 0, %s177
    %s197 = sphi 0, %s199
    %s200 = sphi 0, %s197
    %s201 = sphi 0, %s200
    %s217 = sphi 0, %s201
  $region4: #{autoencoder_forward.1} parent=0 // loop_header_branch
    %17 = sbr.rel (%p15) target = $region8
  $region5: #{autoencoder_forward.1} parent=0 // loop_body
    %s19 = ssub.s32 %s14, 1
    %s20 = ssub.s32 %s14, 2
    %s21 = sadd.s32 %s14, 1
    %s22 = ssub.s32 %s14, %s21
    %p23 = scmp.eq.s32.totalorder %s22, 0
    %s25 = sadd.s32 %s24, 1
    %s26 = scalar_select %p23, %s24, %s25
    %p29 = pneg %p23
    %p30 = scmp.eq.s32.totalorder %s14, 1
    %p31 = por %p29, %p30
    %p32 = scmp.ne.s32.totalorder %s24, %s27
    %p33 = scmp.eq.s32.totalorder %s14, 0
    %p34 = por %p32, %p33
    %p35 = scmp.ne.s32.totalorder %s24, %s27
    %p36 = scmp.eq.s32.totalorder %s19, 1
    %p37 = por %p35, %p36
    %p38 = scmp.ne.s32.totalorder %s27, %s28
    %p39 = scmp.eq.s32.totalorder %s19, 0
    %p40 = por %p38, %p39
    %p41 = scmp.ne.s32.totalorder %s27, %s28
    %p42 = scmp.eq.s32.totalorder %s20, 1
    %p43 = por %p41, %p42
    %p45 = scmp.ne.s32.totalorder %s28, %s44
    %p46 = scmp.eq.s32.totalorder %s20, 0
    %p47 = por %p45, %p46
    %s49 = sadd.s32 %s48, 1
    %p52 = scmp.eq.s32.totalorder %s14, 1
    %p53 = scmp.ne.s32.totalorder %s48, %s50
    %p54 = scmp.eq.s32.totalorder %s14, 0
    %p55 = por %p53, %p54
    %p56 = scmp.ne.s32.totalorder %s48, %s50
    %p57 = scmp.eq.s32.totalorder %s19, 1
    %p58 = por %p56, %p57
    %p59 = scmp.ne.s32.totalorder %s50, %s51
    %p60 = scmp.eq.s32.totalorder %s19, 0
    %p61 = por %p59, %p60
    %p62 = scmp.ne.s32.totalorder %s50, %s51
    %p63 = scmp.eq.s32.totalorder %s20, 1
    %p64 = por %p62, %p63
    %p66 = scmp.ne.s32.totalorder %s51, %s65
    %p67 = scmp.eq.s32.totalorder %s20, 0
    %p68 = por %p66, %p67
    %s70 = sadd.s32 %s69, 1
    %p73 = scmp.eq.s32.totalorder %s14, 1
    %p74 = scmp.ne.s32.totalorder %s69, %s71
    %p75 = scmp.eq.s32.totalorder %s14, 0
    %p76 = por %p74, %p75
    %p77 = scmp.ne.s32.totalorder %s69, %s71
    %p78 = scmp.eq.s32.totalorder %s19, 1
    %p79 = por %p77, %p78
    %p80 = scmp.ne.s32.totalorder %s71, %s72
    %p81 = scmp.eq.s32.totalorder %s19, 0
    %p82 = por %p80, %p81
    %p83 = scmp.ne.s32.totalorder %s71, %s72
    %p84 = scmp.eq.s32.totalorder %s20, 1
    %p85 = por %p83, %p84
    %p87 = scmp.ne.s32.totalorder %s72, %s86
    %p88 = scmp.eq.s32.totalorder %s20, 0
    %p89 = por %p87, %p88
    %s91 = sadd.s32 %s90, 1
    %p94 = scmp.eq.s32.totalorder %s14, 1
    %p95 = scmp.ne.s32.totalorder %s90, %s92
    %p96 = scmp.eq.s32.totalorder %s14, 0
    %p97 = por %p95, %p96
    %p98 = scmp.ne.s32.totalorder %s90, %s92
    %p99 = scmp.eq.s32.totalorder %s19, 1
    %p100 = por %p98, %p99
    %p101 = scmp.ne.s32.totalorder %s92, %s93
    %p102 = scmp.eq.s32.totalorder %s19, 0
    %p103 = por %p101, %p102
    %p104 = scmp.ne.s32.totalorder %s92, %s93
    %p105 = scmp.eq.s32.totalorder %s20, 1
    %p106 = por %p104, %p105
    %p108 = scmp.ne.s32.totalorder %s93, %s107
    %p109 = scmp.eq.s32.totalorder %s20, 0
    %p110 = por %p108, %p109
    %s112 = sadd.s32 %s111, 1
    %p115 = scmp.eq.s32.totalorder %s14, 1
    %p116 = scmp.ne.s32.totalorder %s111, %s113
    %p117 = scmp.eq.s32.totalorder %s14, 0
    %p118 = por %p116, %p117
    %p119 = scmp.ne.s32.totalorder %s111, %s113
    %p120 = scmp.eq.s32.totalorder %s19, 1
    %p121 = por %p119, %p120
    %p122 = scmp.ne.s32.totalorder %s113, %s114
    %p123 = scmp.eq.s32.totalorder %s19, 0
    %p124 = por %p122, %p123
    %p125 = scmp.ne.s32.totalorder %s113, %s114
    %p126 = scmp.eq.s32.totalorder %s20, 1
    %p127 = por %p125, %p126
    %p129 = scmp.ne.s32.totalorder %s114, %s128
    %p130 = scmp.eq.s32.totalorder %s20, 0
    %p131 = por %p129, %p130
    %s133 = sadd.s32 %s132, 1
    %p136 = scmp.eq.s32.totalorder %s14, 1
    %p137 = scmp.ne.s32.totalorder %s132, %s134
    %p138 = scmp.eq.s32.totalorder %s14, 0
    %p139 = por %p137, %p138
    %p140 = scmp.ne.s32.totalorder %s132, %s134
    %p141 = scmp.eq.s32.totalorder %s19, 1
    %p142 = por %p140, %p141
    %p143 = scmp.ne.s32.totalorder %s134, %s135
    %p144 = scmp.eq.s32.totalorder %s19, 0
    %p145 = por %p143, %p144
    %p146 = scmp.ne.s32.totalorder %s134, %s135
    %p147 = scmp.eq.s32.totalorder %s20, 1
    %p148 = por %p146, %p147
    %p150 = scmp.ne.s32.totalorder %s135, %s149
    %p151 = scmp.eq.s32.totalorder %s20, 0
    %p152 = por %p150, %p151
    %s154 = sadd.s32 %s153, 1
    %p157 = scmp.eq.s32.totalorder %s14, 1
    %p158 = scmp.ne.s32.totalorder %s153, %s155
    %p159 = scmp.eq.s32.totalorder %s14, 0
    %p160 = por %p158, %p159
    %p161 = scmp.ne.s32.totalorder %s153, %s155
    %p162 = scmp.eq.s32.totalorder %s19, 1
    %p163 = por %p161, %p162
    %p164 = scmp.ne.s32.totalorder %s155, %s156
    %p165 = scmp.eq.s32.totalorder %s19, 0
    %p166 = por %p164, %p165
    %p167 = scmp.ne.s32.totalorder %s155, %s156
    %p168 = scmp.eq.s32.totalorder %s20, 1
    %p169 = por %p167, %p168
    %p171 = scmp.ne.s32.totalorder %s156, %s170
    %p172 = scmp.eq.s32.totalorder %s20, 0
    %p173 = por %p171, %p172
    %s175 = sadd.s32 %s174, 1
    %p178 = scmp.eq.s32.totalorder %s14, 1
    %p179 = scmp.ne.s32.totalorder %s174, %s176
    %p180 = scmp.eq.s32.totalorder %s14, 0
    %p181 = por %p179, %p180
    %p182 = scmp.ne.s32.totalorder %s174, %s176
    %p183 = scmp.eq.s32.totalorder %s19, 1
    %p184 = por %p182, %p183
    %p185 = scmp.ne.s32.totalorder %s176, %s177
    %p186 = scmp.eq.s32.totalorder %s19, 0
    %p187 = por %p185, %p186
    %p188 = scmp.ne.s32.totalorder %s176, %s177
    %p189 = scmp.eq.s32.totalorder %s20, 1
    %p190 = por %p188, %p189
    %p192 = scmp.ne.s32.totalorder %s177, %s191
    %p193 = scmp.eq.s32.totalorder %s20, 0
    %p194 = por %p192, %p193
    %s195 = ssub.s32 %s14, %s21
    %p196 = scmp.eq.s32.totalorder %s195, 0
    %s198 = sadd.s32 %s197, 1
    %s199 = scalar_select %p196, %s197, %s198
    %p202 = pneg %p196
    %p203 = scmp.eq.s32.totalorder %s14, 1
    %p204 = por %p202, %p203
    %p205 = scmp.ne.s32.totalorder %s197, %s200
    %p206 = scmp.eq.s32.totalorder %s14, 0
    %p207 = por %p205, %p206
    %p208 = scmp.ne.s32.totalorder %s197, %s200
    %p209 = scmp.eq.s32.totalorder %s19, 1
    %p210 = por %p208, %p209
    %p211 = scmp.ne.s32.totalorder %s200, %s201
    %p212 = scmp.eq.s32.totalorder %s19, 0
    %p213 = por %p211, %p212
    %p214 = scmp.ne.s32.totalorder %s200, %s201
    %p215 = scmp.eq.s32.totalorder %s20, 1
    %p216 = por %p214, %p215
    %p218 = scmp.ne.s32.totalorder %s201, %s217
    %p219 = scmp.eq.s32.totalorder %s20, 0
    %p220 = por %p218, %p219
    %p221 = scmp.le.s32.totalorder 1, %s14
    %p222 = scmp.lt.s32.totalorder %s14, 3
    %p223 = pnand %p221, %p222
    %p224 = pneg %p223
    // Predicated region
    $region9: #{autoencoder_forward.1} parent=5 // pred_check
      _
    $region10: #{autoencoder_forward.1} parent=5 // pred_check_branch
      %226 = sbr.rel (%p223) target = $region12
    $region11: #{autoencoder_forward.1} parent=5 // pred_region
      %s227 = ssub.s32 %s14, 1
      // Predicated region
      $region13: #{autoencoder_forward.1} parent=11 // pred_check
        %p228 = pneg %p61
      $region14: #{autoencoder_forward.1} parent=11 // pred_check_branch
        %230 = sbr.rel (%p228) target = $region16
      $region15: #{autoencoder_forward.1} parent=11 // pred_region
        _
      $region16: #{autoencoder_forward.1} parent=11 // pred_fallthru
        _
      // Predicated region
      $region17: #{autoencoder_forward.1} parent=11 // pred_check
        %p231 = pneg %p82
      $region18: #{autoencoder_forward.1} parent=11 // pred_check_branch
        %233 = sbr.rel (%p231) target = $region20
      $region19: #{autoencoder_forward.1} parent=11 // pred_region
        _
      $region20: #{autoencoder_forward.1} parent=11 // pred_fallthru
        _
      // Predicated region
      $region21: #{autoencoder_forward.1} parent=11 // pred_check
        %p234 = pneg %p103
      $region22: #{autoencoder_forward.1} parent=11 // pred_check_branch
        %236 = sbr.rel (%p234) target = $region24
      $region23: #{autoencoder_forward.1} parent=11 // pred_region
        _
      $region24: #{autoencoder_forward.1} parent=11 // pred_fallthru
        _
      // Predicated region
      $region25: #{autoencoder_forward.1} parent=11 // pred_check
        %p237 = pneg %p124
      $region26: #{autoencoder_forward.1} parent=11 // pred_check_branch
        %239 = sbr.rel (%p237) target = $region28
      $region27: #{autoencoder_forward.1} parent=11 // pred_region
        _
      $region28: #{autoencoder_forward.1} parent=11 // pred_fallthru
        _
      // Predicated region
      $region29: #{autoencoder_forward.1} parent=11 // pred_check
        %p240 = pneg %p145
      $region30: #{autoencoder_forward.1} parent=11 // pred_check_branch
        %242 = sbr.rel (%p240) target = $region32
      $region31: #{autoencoder_forward.1} parent=11 // pred_region
        _
      $region32: #{autoencoder_forward.1} parent=11 // pred_fallthru
        _
      // Predicated region
      $region33: #{autoencoder_forward.1} parent=11 // pred_check
        %p243 = pneg %p166
      $region34: #{autoencoder_forward.1} parent=11 // pred_check_branch
        %245 = sbr.rel (%p243) target = $region36
      $region35: #{autoencoder_forward.1} parent=11 // pred_region
        _
      $region36: #{autoencoder_forward.1} parent=11 // pred_fallthru
        _
      // Predicated region
      $region37: #{autoencoder_forward.1} parent=11 // pred_check
        %p246 = pneg %p187
      $region38: #{autoencoder_forward.1} parent=11 // pred_check_branch
        %248 = sbr.rel (%p246) target = $region40
      $region39: #{autoencoder_forward.1} parent=11 // pred_region
        _
      $region40: #{autoencoder_forward.1} parent=11 // pred_fallthru
        _
    $region12: #{autoencoder_forward.1} parent=5 // pred_fallthru
      _
    %p249 = scmp.lt.s32.totalorder %s14, 2
    // Predicated region
    $region41: #{autoencoder_forward.1} parent=5 // pred_check
      %p250 = pneg %p249
    $region42: #{autoencoder_forward.1} parent=5 // pred_check_branch
      %252 = sbr.rel (%p250) target = $region44
    $region43: #{autoencoder_forward.1} parent=5 // pred_region
      // Predicated region
      $region45: #{autoencoder_forward.1} parent=43 // pred_check
        %p253 = pneg %p34
      $region46: #{autoencoder_forward.1} parent=43 // pred_check_branch
        %255 = sbr.rel (%p253) target = $region48
      $region47: #{autoencoder_forward.1} parent=43 // pred_region
        %s256 = smul.u32 38, %s14
        %p257 = scmp.lt.s32.totalorder %s256, 75
        %s258 = scalar_select %p257, %s256, 75
        %s259 = smul.addr %s258, 4
        %s260 = scalar_lea.vmem %s0, %s259
        %s261 = smul.u32 38, %s14
      $region48: #{autoencoder_forward.1} parent=43 // pred_fallthru
        _
    $region44: #{autoencoder_forward.1} parent=5 // pred_fallthru
      _
    %p262 = scmp.le.s32.totalorder 1, %s14
    %p263 = scmp.lt.s32.totalorder %s14, 3
    %p264 = pnand %p262, %p263
    %p265 = pneg %p264
    // Predicated region
    $region49: #{autoencoder_forward.1} parent=5 // pred_check
      _
    $region50: #{autoencoder_forward.1} parent=5 // pred_check_branch
      %267 = sbr.rel (%p264) target = $region52
    $region51: #{autoencoder_forward.1} parent=5 // pred_region
      %s268 = ssub.s32 %s14, 1
      %s269 = smul.u32 38, %s19
      %p270 = scmp.lt.s32.totalorder %s269, 75
      %s271 = scalar_select %p270, %s269, 75
      %s272 = smul.addr %s271, 4
      %s273 = scalar_lea.vmem %s0, %s272
      %p274 = pneg %p40
      %p275 = pneg %p37
      %p276 = pneg %p61
      %p277 = pneg %p58
      %p278 = pneg %p82
      %p279 = pneg %p79
      %p280 = pneg %p103
      %p281 = pneg %p100
      %p282 = pneg %p124
      %p283 = pneg %p121
      %p284 = pneg %p145
      %p285 = pneg %p142
      %p286 = pneg %p166
      %p287 = pneg %p163
      %p288 = pneg %p187
      %p289 = pneg %p184
      %p290 = pneg %p213
      %p291 = pneg %p210
      %s292 = smul.u32 38, %s19
      %p293 = scmp.lt.s32.totalorder %s292, 75
      %s294 = scalar_select %p293, %s292, 75
      %s295 = smul.addr %s294, 8
      %s296 = scalar_lea.vmem %s8, %s295
      %s297 = smul.u32 38, %s19
      %p298 = scmp.lt.s32.totalorder %s297, 75
      %s299 = scalar_select %p298, %s297, 75
      %s300 = smul.addr %s299, 4
      %s301 = scalar_lea.vmem %s0, %s300
      %s302 = smul.u32 38, %s19
      %s303 = smul.u32 38, %s19
      %p304 = scmp.lt.s32.totalorder %s303, 75
      %s305 = scalar_select %p304, %s303, 75
      %s306 = smul.addr %s305, 8
      %s307 = scalar_lea.vmem %s8, %s306
      %s308 = smul.u32 38, %s19
      %v310 = vld [vmem:[%s6] sm:$0x1]
      %v311 = vld [vmem:[%s6 + $0x1] sm:$0x1]
      %v312 = vld [vmem:[%s6 + $0x2] sm:$0x1]
      %v313 = vld [vmem:[%s6 + $0x3] sm:$0x1]
      %v314 = vld [vmem:[%s301] sm:$0xf]
      %v315 = vld [vmem:[%s301 + $0x4] sm:$0xf]
      %v316 = vld [vmem:[%s301 + $0x8] sm:$0xf]
      %v317 = vld [vmem:[%s301 + $0xc] sm:$0xf]
      %v318 = vld [vmem:[%s301 + $0x10] sm:$0xf]
      %v319 = vld [vmem:[%s301 + $0x14] sm:$0xf]
      %v320 = vld [vmem:[%s301 + $0x18] sm:$0xf]
      %v321 = vld [vmem:[%s301 + $0x1c] sm:$0xf]
      %v322 = vld [vmem:[%s301 + $0x20] sm:$0xf]
      %v323 = vld [vmem:[%s301 + $0x24] sm:$0xf]
      %v324 = vld [vmem:[%s301 + $0x28] sm:$0xf]
      %v325 = vld [vmem:[%s301 + $0x2c] sm:$0xf]
      %v326 = vld [vmem:[%s301 + $0x30] sm:$0xf]
      %v327 = vld [vmem:[%s301 + $0x34] sm:$0xf]
      %v328 = vld [vmem:[%s301 + $0x38] sm:$0xf]
      %v329 = vld [vmem:[%s301 + $0x3c] sm:$0xf]
      %v330 = vld [vmem:[%s301 + $0x40] sm:$0xf]
      %v331 = vld [vmem:[%s301 + $0x44] sm:$0xf]
      %v332 = vld [vmem:[%s301 + $0x48] sm:$0xf]
      %v333 = vld [vmem:[%s301 + $0x4c] sm:$0xf]
      %v334 = vld [vmem:[%s301 + $0x50] sm:$0xf]
      %v335 = vld [vmem:[%s301 + $0x54] sm:$0xf]
      %v336 = vld [vmem:[%s301 + $0x58] sm:$0xf]
      %v337 = vld [vmem:[%s301 + $0x5c] sm:$0xf]
      %v338 = vld [vmem:[%s301 + $0x60] sm:$0xf]
      %v339 = vld [vmem:[%s301 + $0x64] sm:$0xf]
      %v340 = vld [vmem:[%s301 + $0x68] sm:$0xf]
      %v341 = vld [vmem:[%s301 + $0x6c] sm:$0xf]
      %v342 = vld [vmem:[%s301 + $0x70] sm:$0xf]
      %v343 = vld [vmem:[%s301 + $0x74] sm:$0xf]
      %v344 = vld [vmem:[%s301 + $0x78] sm:$0xf]
      %v345 = vld [vmem:[%s301 + $0x7c] sm:$0xf]
      %v346 = vld [vmem:[%s301 + $0x80] sm:$0xf]
      %v347 = vld [vmem:[%s301 + $0x84] sm:$0xf]
      %v348 = vld [vmem:[%s301 + $0x88] sm:$0xf]
      %v349 = vld [vmem:[%s301 + $0x8c] sm:$0xf]
      %v350 = vld [vmem:[%s301 + $0x90] sm:$0xf]
      %v351 = vld [vmem:[%s301 + $0x94] sm:$0xf]
      %v352 = vld [vmem:[%s1] sm:$0xf]
      %v353 = vld [vmem:[%s1 + $0x4] sm:$0xf]
      %v354 = vld [vmem:[%s1 + $0x8] sm:$0xf]
      %v355 = vld [vmem:[%s1 + $0xc] sm:$0xf]
      %v356 = vld [vmem:[%s1 + $0x10] sm:$0xf]
      %v357 = vld [vmem:[%s1 + $0x14] sm:$0xf]
      %v358 = vld [vmem:[%s1 + $0x18] sm:$0xf]
      %v359 = vld [vmem:[%s1 + $0x1c] sm:$0xf]
      %v360 = vld [vmem:[%s1 + $0x20] sm:$0xf]
      %v361 = vld [vmem:[%s1 + $0x24] sm:$0xf]
      %v362 = vld [vmem:[%s1 + $0x28] sm:$0xf]
      %v363 = vld [vmem:[%s1 + $0x2c] sm:$0xf]
      %v364 = vld [vmem:[%s1 + $0x30] sm:$0xf]
      %v365 = vld [vmem:[%s1 + $0x34] sm:$0xf]
      %v366 = vld [vmem:[%s1 + $0x38] sm:$0xf]
      %v367 = vld [vmem:[%s1 + $0x3c] sm:$0xf]
      %v368 = vlaneseq
      %v369 = vshrl.u32 %v368, 7
      %v370 = vsub.s32 0, %v369
      %v371 = vrot.slane %v310, %v370
      %v410 = vunpack.c.l.b16 %v314
      %v411 = vunpack.c.l.b16 %v315
      %v412 = vunpack.c.l.b16 %v316
      %v413 = vunpack.c.l.b16 %v317
      %v414 = vunpack.c.l.b16 %v318
      %v415 = vunpack.c.l.b16 %v319
      %v416 = vunpack.c.l.b16 %v320
      %v417 = vunpack.c.l.b16 %v321
      %v418 = vunpack.c.l.b16 %v322
      %v419 = vunpack.c.l.b16 %v323
      %v420 = vunpack.c.l.b16 %v324
      %v421 = vunpack.c.l.b16 %v325
      %v422 = vunpack.c.l.b16 %v326
      %v423 = vunpack.c.l.b16 %v327
      %v424 = vunpack.c.l.b16 %v328
      %v425 = vunpack.c.l.b16 %v329
      %v426 = vunpack.c.l.b16 %v330
      %v427 = vunpack.c.l.b16 %v331
      %v428 = vunpack.c.l.b16 %v332
      %v429 = vunpack.c.l.b16 %v333
      %v430 = vunpack.c.l.b16 %v334
      %v431 = vunpack.c.l.b16 %v335
      %v432 = vunpack.c.l.b16 %v336
      %v433 = vunpack.c.l.b16 %v337
      %v434 = vunpack.c.l.b16 %v338
      %v435 = vunpack.c.l.b16 %v339
      %v436 = vunpack.c.l.b16 %v340
      %v437 = vunpack.c.l.b16 %v341
      %v438 = vunpack.c.l.b16 %v342
      %v439 = vunpack.c.l.b16 %v343
      %v440 = vunpack.c.l.b16 %v344
      %v441 = vunpack.c.l.b16 %v345
      %v442 = vunpack.c.l.b16 %v346
      %v443 = vunpack.c.l.b16 %v347
      %v444 = vunpack.c.l.b16 %v348
      %v445 = vunpack.c.l.b16 %v349
      %v446 = vunpack.c.l.b16 %v350
      %v447 = vunpack.c.l.b16 %v351
      %v448 = vpack.c.b16 %v411, %v410
      %v449 = vpack.c.b16 %v413, %v412
      %v450 = vpack.c.b16 %v415, %v414
      %v451 = vpack.c.b16 %v417, %v416
      %v452 = vpack.c.b16 %v419, %v418
      %v453 = vpack.c.b16 %v421, %v420
      %v454 = vpack.c.b16 %v423, %v422
      %v455 = vpack.c.b16 %v425, %v424
      %v456 = vpack.c.b16 %v427, %v426
      %v457 = vpack.c.b16 %v429, %v428
      %v458 = vpack.c.b16 %v431, %v430
      %v459 = vpack.c.b16 %v433, %v432
      %v460 = vpack.c.b16 %v435, %v434
      %v461 = vpack.c.b16 %v437, %v436
      %v462 = vpack.c.b16 %v439, %v438
      %v463 = vpack.c.b16 %v441, %v440
      %v464 = vpack.c.b16 %v443, %v442
      %v465 = vpack.c.b16 %v445, %v444
      %v466 = vpack.c.b16 %v447, %v446
      %v502 = vunpack.c.l.b16 %v352
      %v503 = vunpack.c.l.b16 %v353
      %v504 = vunpack.c.l.b16 %v354
      %v505 = vunpack.c.l.b16 %v355
      %v506 = vunpack.c.l.b16 %v356
      %v507 = vunpack.c.l.b16 %v357
      %v508 = vunpack.c.l.b16 %v358
      %v509 = vunpack.c.l.b16 %v359
      %v510 = vunpack.c.l.b16 %v360
      %v511 = vunpack.c.l.b16 %v361
      %v512 = vunpack.c.l.b16 %v362
      %v513 = vunpack.c.l.b16 %v363
      %v514 = vunpack.c.l.b16 %v364
      %v515 = vunpack.c.l.b16 %v365
      %v516 = vunpack.c.l.b16 %v366
      %v517 = vunpack.c.l.b16 %v367
      %v518 = vpack.c.b16 %v503, %v502
      %v519 = vpack.c.b16 %v505, %v504
      %v520 = vpack.c.b16 %v507, %v506
      %v521 = vpack.c.b16 %v509, %v508
      %v522 = vpack.c.b16 %v511, %v510
      %v523 = vpack.c.b16 %v513, %v512
      %v524 = vpack.c.b16 %v515, %v514
      %v525 = vpack.c.b16 %v517, %v516
      %534 = vmatprep.subr.bf16.mxu0 0
      %535 = vmatpush1.bf16.msra.mxu0 %v525
      %536 = vmatprep.subr.bf16.mxu0 0
      %537 = vmatpush1.bf16.msra.mxu0 %v524
      %538 = vmatprep.subr.bf16.mxu0 0
      %539 = vmatpush1.bf16.msra.mxu0 %v523
      %540 = vmatprep.subr.bf16.mxu0 0
      %541 = vmatpush1.bf16.msra.mxu0 %v522
      %542 = vmatprep.subr.bf16.mxu0 0
      %543 = vmatpush1.bf16.msra.mxu0 %v521
      %544 = vmatprep.subr.bf16.mxu0 0
      %545 = vmatpush1.bf16.msra.mxu0 %v520
      %546 = vmatprep.subr.bf16.mxu0 0
      %547 = vmatpush1.bf16.msra.mxu0 %v519
      %548 = vmatprep.subr.bf16.mxu0 0
      %549 = vmatpush1.bf16.msra.mxu0 %v518
      %550 = vmatprep.subr.bf16.mxu0 0
      %551 = vmatpush2.bf16.msra.mxu0 0
      %552 = vmatprep.subr.bf16.mxu0 0
      %553 = vmatpush2.bf16.msra.mxu0 0
      %554 = vmatprep.subr.bf16.mxu0 0
      %555 = vmatpush2.bf16.msra.mxu0 0
      %556 = vmatprep.subr.bf16.mxu0 0
      %557 = vmatpush2.bf16.msra.mxu0 0
      %558 = vmatprep.subr.bf16.mxu0 0
      %559 = vmatpush2.bf16.msra.mxu0 0
      %560 = vmatprep.subr.bf16.mxu0 0
      %561 = vmatpush2.bf16.msra.mxu0 0
      %562 = vmatprep.subr.bf16.mxu0 0
      %563 = vmatpush2.bf16.msra.mxu0 0
      %564 = vmatprep.subr.bf16.mxu0 0
      %565 = vmatpush2.bf16.msra.mxu0 0
      %566 = vmatprep.mubr.bf16.mxu0 0
      %567 = vmatmul.mubr.bf16.gmra.mxu0 %v448
      %v568 = vpop.f32.mrf.mxu0
      %v569 = vadd.f32 %v371, %v568
      %v570 = vpop.f32.mrf.mxu0
      %v571 = vpop.f32.mrf.mxu0
      %v572 = vadd.f32 %v371, %v571
      %v573 = vpop.f32.mrf.mxu0
      %574 = vmatprep.mubr.bf16.mxu0 0
      %575 = vmatmul.mubr.bf16.gmra.mxu0 %v449
      %v576 = vpop.f32.mrf.mxu0
      %v577 = vadd.f32 %v371, %v576
      %v578 = vpop.f32.mrf.mxu0
      %v579 = vpop.f32.mrf.mxu0
      %v580 = vadd.f32 %v371, %v579
      %v581 = vpop.f32.mrf.mxu0
      %582 = vmatprep.mubr.bf16.mxu0 0
      %583 = vmatmul.mubr.bf16.gmra.mxu0 %v450
      %v584 = vpop.f32.mrf.mxu0
      %v585 = vadd.f32 %v371, %v584
      %v586 = vpop.f32.mrf.mxu0
      %v587 = vpop.f32.mrf.mxu0
      %v588 = vadd.f32 %v371, %v587
      %v589 = vpop.f32.mrf.mxu0
      %590 = vmatprep.mubr.bf16.mxu0 0
      %591 = vmatmul.mubr.bf16.gmra.mxu0 %v451
      %v592 = vpop.f32.mrf.mxu0
      %v593 = vadd.f32 %v371, %v592
      %v594 = vpop.f32.mrf.mxu0
      %v595 = vpop.f32.mrf.mxu0
      %v596 = vadd.f32 %v371, %v595
      %v597 = vpop.f32.mrf.mxu0
      %598 = vmatprep.mubr.bf16.mxu0 0
      %599 = vmatmul.mubr.bf16.gmra.mxu0 %v452
      %v600 = vpop.f32.mrf.mxu0
      %v601 = vadd.f32 %v371, %v600
      %v602 = vpop.f32.mrf.mxu0
      %v603 = vpop.f32.mrf.mxu0
      %v604 = vadd.f32 %v371, %v603
      %v605 = vpop.f32.mrf.mxu0
      %606 = vmatprep.mubr.bf16.mxu0 0
      %607 = vmatmul.mubr.bf16.gmra.mxu0 %v453
      %v608 = vpop.f32.mrf.mxu0
      %v609 = vadd.f32 %v371, %v608
      %v610 = vpop.f32.mrf.mxu0
      %v611 = vpop.f32.mrf.mxu0
      %v612 = vadd.f32 %v371, %v611
      %v613 = vpop.f32.mrf.mxu0
      %614 = vmatprep.mubr.bf16.mxu0 0
      %615 = vmatmul.mubr.bf16.gmra.mxu0 %v454
      %v616 = vpop.f32.mrf.mxu0
      %v617 = vadd.f32 %v371, %v616
      %v618 = vpop.f32.mrf.mxu0
      %v619 = vpop.f32.mrf.mxu0
      %v620 = vadd.f32 %v371, %v619
      %v621 = vpop.f32.mrf.mxu0
      %622 = vmatprep.mubr.bf16.mxu0 0
      %623 = vmatmul.mubr.bf16.gmra.mxu0 %v455
      %v624 = vpop.f32.mrf.mxu0
      %v625 = vadd.f32 %v371, %v624
      %v626 = vpop.f32.mrf.mxu0
      %v627 = vpop.f32.mrf.mxu0
      %v628 = vadd.f32 %v371, %v627
      %v629 = vpop.f32.mrf.mxu0
      %630 = vmatprep.mubr.bf16.mxu0 0
      %631 = vmatmul.mubr.bf16.gmra.mxu0 %v456
      %v632 = vpop.f32.mrf.mxu0
      %v633 = vadd.f32 %v371, %v632
      %v634 = vpop.f32.mrf.mxu0
      %v635 = vpop.f32.mrf.mxu0
      %v636 = vadd.f32 %v371, %v635
      %v637 = vpop.f32.mrf.mxu0
      %638 = vmatprep.mubr.bf16.mxu0 0
      %639 = vmatmul.mubr.bf16.gmra.mxu0 %v457
      %v640 = vpop.f32.mrf.mxu0
      %v641 = vadd.f32 %v371, %v640
      %v642 = vpop.f32.mrf.mxu0
      %v643 = vpop.f32.mrf.mxu0
      %v644 = vadd.f32 %v371, %v643
      %v645 = vpop.f32.mrf.mxu0
      %646 = vmatprep.mubr.bf16.mxu0 0
      %647 = vmatmul.mubr.bf16.gmra.mxu0 %v458
      %v648 = vpop.f32.mrf.mxu0
      %v649 = vadd.f32 %v371, %v648
      %v650 = vpop.f32.mrf.mxu0
      %v651 = vpop.f32.mrf.mxu0
      %v652 = vadd.f32 %v371, %v651
      %v653 = vpop.f32.mrf.mxu0
      %654 = vmatprep.mubr.bf16.mxu0 0
      %655 = vmatmul.mubr.bf16.gmra.mxu0 %v459
      %v656 = vpop.f32.mrf.mxu0
      %v657 = vadd.f32 %v371, %v656
      %v658 = vpop.f32.mrf.mxu0
      %v659 = vpop.f32.mrf.mxu0
      %v660 = vadd.f32 %v371, %v659
      %v661 = vpop.f32.mrf.mxu0
      %662 = vmatprep.mubr.bf16.mxu0 0
      %663 = vmatmul.mubr.bf16.gmra.mxu0 %v460
      %v664 = vpop.f32.mrf.mxu0
      %v665 = vadd.f32 %v371, %v664
      %v666 = vpop.f32.mrf.mxu0
      %v667 = vpop.f32.mrf.mxu0
      %v668 = vadd.f32 %v371, %v667
      %v669 = vpop.f32.mrf.mxu0
      %670 = vmatprep.mubr.bf16.mxu0 0
      %671 = vmatmul.mubr.bf16.gmra.mxu0 %v461
      %v672 = vpop.f32.mrf.mxu0
      %v673 = vadd.f32 %v371, %v672
      %v674 = vpop.f32.mrf.mxu0
      %v675 = vpop.f32.mrf.mxu0
      %v676 = vadd.f32 %v371, %v675
      %v677 = vpop.f32.mrf.mxu0
      %678 = vmatprep.mubr.bf16.mxu0 0
      %679 = vmatmul.mubr.bf16.gmra.mxu0 %v462
      %v680 = vpop.f32.mrf.mxu0
      %v681 = vadd.f32 %v371, %v680
      %v682 = vpop.f32.mrf.mxu0
      %v683 = vpop.f32.mrf.mxu0
      %v684 = vadd.f32 %v371, %v683
      %v685 = vpop.f32.mrf.mxu0
      %686 = vmatprep.mubr.bf16.mxu0 0
      %687 = vmatmul.mubr.bf16.gmra.mxu0 %v463
      %v688 = vpop.f32.mrf.mxu0
      %v689 = vadd.f32 %v371, %v688
      %v690 = vpop.f32.mrf.mxu0
      %v691 = vpop.f32.mrf.mxu0
      %v692 = vadd.f32 %v371, %v691
      %v693 = vpop.f32.mrf.mxu0
      %694 = vmatprep.mubr.bf16.mxu0 0
      %695 = vmatmul.mubr.bf16.gmra.mxu0 %v464
      %v696 = vpop.f32.mrf.mxu0
      %v697 = vadd.f32 %v371, %v696
      %v698 = vpop.f32.mrf.mxu0
      %v699 = vpop.f32.mrf.mxu0
      %v700 = vadd.f32 %v371, %v699
      %v701 = vpop.f32.mrf.mxu0
      %702 = vmatprep.mubr.bf16.mxu0 0
      %703 = vmatmul.mubr.bf16.gmra.mxu0 %v465
      %v704 = vpop.f32.mrf.mxu0
      %v705 = vadd.f32 %v371, %v704
      %v706 = vpop.f32.mrf.mxu0
      %v707 = vpop.f32.mrf.mxu0
      %v708 = vadd.f32 %v371, %v707
      %v709 = vpop.f32.mrf.mxu0
      %710 = vmatprep.mubr.bf16.mxu0 0
      %711 = vmatmul.mubr.bf16.gmra.mxu0 %v466
      %v712 = vpop.f32.mrf.mxu0
      %v713 = vadd.f32 %v371, %v712
      %v714 = vpop.f32.mrf.mxu0
      %v715 = vpop.f32.mrf.mxu0
      %v716 = vadd.f32 %v371, %v715
      %v717 = vpop.f32.mrf.mxu0
      %718 = vdwg.mxu0
      %v719 = vmax.f32 %v569, 0.0
      %v720 = vmax.f32 %v572, 0.0
      %v721 = vmax.f32 %v577, 0.0
      %v722 = vmax.f32 %v580, 0.0
      %v723 = vmax.f32 %v585, 0.0
      %v724 = vmax.f32 %v588, 0.0
      %v725 = vmax.f32 %v593, 0.0
      %v726 = vmax.f32 %v596, 0.0
      %v727 = vmax.f32 %v601, 0.0
      %v728 = vmax.f32 %v604, 0.0
      %v729 = vmax.f32 %v609, 0.0
      %v730 = vmax.f32 %v612, 0.0
      %v731 = vmax.f32 %v617, 0.0
      %v732 = vmax.f32 %v620, 0.0
      %v733 = vmax.f32 %v625, 0.0
      %v734 = vmax.f32 %v628, 0.0
      %v735 = vmax.f32 %v633, 0.0
      %v736 = vmax.f32 %v636, 0.0
      %v737 = vmax.f32 %v641, 0.0
      %v738 = vmax.f32 %v644, 0.0
      %v739 = vmax.f32 %v649, 0.0
      %v740 = vmax.f32 %v652, 0.0
      %v741 = vmax.f32 %v657, 0.0
      %v742 = vmax.f32 %v660, 0.0
      %v743 = vmax.f32 %v665, 0.0
      %v744 = vmax.f32 %v668, 0.0
      %v745 = vmax.f32 %v673, 0.0
      %v746 = vmax.f32 %v676, 0.0
      %v747 = vmax.f32 %v681, 0.0
      %v748 = vmax.f32 %v684, 0.0
      %v749 = vmax.f32 %v689, 0.0
      %v750 = vmax.f32 %v692, 0.0
      %v751 = vmax.f32 %v697, 0.0
      %v752 = vmax.f32 %v700, 0.0
      %v753 = vmax.f32 %v705, 0.0
      %v754 = vmax.f32 %v708, 0.0
      %v755 = vmax.f32 %v713, 0.0
      %v756 = vmax.f32 %v716, 0.0
      %v757 = vpack.c.bf16 %v720, %v719
      %v758 = vpack.c.bf16 %v722, %v721
      %v759 = vpack.c.bf16 %v724, %v723
      %v760 = vpack.c.bf16 %v726, %v725
      %v761 = vpack.c.bf16 %v728, %v727
      %v762 = vpack.c.bf16 %v730, %v729
      %v763 = vpack.c.bf16 %v732, %v731
      %v764 = vpack.c.bf16 %v734, %v733
      %v765 = vpack.c.bf16 %v736, %v735
      %v766 = vpack.c.bf16 %v738, %v737
      %v767 = vpack.c.bf16 %v740, %v739
      %v768 = vpack.c.bf16 %v742, %v741
      %v769 = vpack.c.bf16 %v744, %v743
      %v770 = vpack.c.bf16 %v746, %v745
      %v771 = vpack.c.bf16 %v748, %v747
      %v772 = vpack.c.bf16 %v750, %v749
      %v773 = vpack.c.bf16 %v752, %v751
      %v774 = vpack.c.bf16 %v754, %v753
      %v775 = vpack.c.bf16 %v756, %v755
      %v776 = vld [vmem:[%s2] sm:$0xf]
      %v777 = vld [vmem:[%s2 + $0x4] sm:$0xf]
      %v778 = vld [vmem:[%s2 + $0x8] sm:$0xf]
      %v779 = vld [vmem:[%s2 + $0xc] sm:$0xf]
      %v780 = vld [vmem:[%s2 + $0x10] sm:$0xf]
      %v781 = vld [vmem:[%s2 + $0x14] sm:$0xf]
      %v782 = vld [vmem:[%s2 + $0x18] sm:$0xf]
      %v783 = vld [vmem:[%s2 + $0x1c] sm:$0xf]
      %v784 = vld [vmem:[%s2 + $0x20] sm:$0xf]
      %v785 = vld [vmem:[%s2 + $0x24] sm:$0xf]
      %v786 = vld [vmem:[%s2 + $0x28] sm:$0xf]
      %v787 = vld [vmem:[%s2 + $0x2c] sm:$0xf]
      %v788 = vld [vmem:[%s2 + $0x30] sm:$0xf]
      %v789 = vld [vmem:[%s2 + $0x34] sm:$0xf]
      %v790 = vld [vmem:[%s2 + $0x38] sm:$0xf]
      %v791 = vld [vmem:[%s2 + $0x3c] sm:$0xf]
      %v792 = vlaneseq
      %v793 = vshrl.u32 %v792, 7
      %v794 = vsub.s32 0, %v793
      %v795 = vrot.slane %v311, %v794
      %v812 = vunpack.c.l.b16 %v776
      %v813 = vunpack.c.l.b16 %v777
      %v814 = vunpack.c.l.b16 %v778
      %v815 = vunpack.c.l.b16 %v779
      %v816 = vunpack.c.l.b16 %v780
      %v817 = vunpack.c.l.b16 %v781
      %v818 = vunpack.c.l.b16 %v782
      %v819 = vunpack.c.l.b16 %v783
      %v820 = vunpack.c.l.b16 %v784
      %v821 = vunpack.c.l.b16 %v785
      %v822 = vunpack.c.l.b16 %v786
      %v823 = vunpack.c.l.b16 %v787
      %v824 = vunpack.c.l.b16 %v788
      %v825 = vunpack.c.l.b16 %v789
      %v826 = vunpack.c.l.b16 %v790
      %v827 = vunpack.c.l.b16 %v791
      %v828 = vpack.c.b16 %v813, %v812
      %v829 = vpack.c.b16 %v815, %v814
      %v830 = vpack.c.b16 %v817, %v816
      %v831 = vpack.c.b16 %v819, %v818
      %v832 = vpack.c.b16 %v821, %v820
      %v833 = vpack.c.b16 %v823, %v822
      %v834 = vpack.c.b16 %v825, %v824
      %v835 = vpack.c.b16 %v827, %v826
      %844 = vmatprep.subr.bf16.mxu0 0
      %845 = vmatpush1.bf16.msra.mxu0 %v835
      %846 = vmatprep.subr.bf16.mxu0 0
      %847 = vmatpush1.bf16.msra.mxu0 %v834
      %848 = vmatprep.subr.bf16.mxu0 0
      %849 = vmatpush1.bf16.msra.mxu0 %v833
      %850 = vmatprep.subr.bf16.mxu0 0
      %851 = vmatpush1.bf16.msra.mxu0 %v832
      %852 = vmatprep.subr.bf16.mxu0 0
      %853 = vmatpush1.bf16.msra.mxu0 %v831
      %854 = vmatprep.subr.bf16.mxu0 0
      %855 = vmatpush1.bf16.msra.mxu0 %v830
      %856 = vmatprep.subr.bf16.mxu0 0
      %857 = vmatpush1.bf16.msra.mxu0 %v829
      %858 = vmatprep.subr.bf16.mxu0 0
      %859 = vmatpush1.bf16.msra.mxu0 %v828
      %860 = vmatprep.subr.bf16.mxu0 0
      %861 = vmatpush2.bf16.msra.mxu0 0
      %862 = vmatprep.subr.bf16.mxu0 0
      %863 = vmatpush2.bf16.msra.mxu0 0
      %864 = vmatprep.subr.bf16.mxu0 0
      %865 = vmatpush2.bf16.msra.mxu0 0
      %866 = vmatprep.subr.bf16.mxu0 0
      %867 = vmatpush2.bf16.msra.mxu0 0
      %868 = vmatprep.subr.bf16.mxu0 0
      %869 = vmatpush2.bf16.msra.mxu0 0
      %870 = vmatprep.subr.bf16.mxu0 0
      %871 = vmatpush2.bf16.msra.mxu0 0
      %872 = vmatprep.subr.bf16.mxu0 0
      %873 = vmatpush2.bf16.msra.mxu0 0
      %874 = vmatprep.subr.bf16.mxu0 0
      %875 = vmatpush2.bf16.msra.mxu0 0
      %876 = vmatprep.mubr.bf16.mxu0 0
      %877 = vmatmul.mubr.bf16.gmra.mxu0 %v757
      %v878 = vpop.f32.mrf.mxu0
      %v879 = vadd.f32 %v795, %v878
      %v880 = vpop.f32.mrf.mxu0
      %v881 = vpop.f32.mrf.mxu0
      %v882 = vadd.f32 %v795, %v881
      %v883 = vpop.f32.mrf.mxu0
      %884 = vmatprep.mubr.bf16.mxu0 0
      %885 = vmatmul.mubr.bf16.gmra.mxu0 %v758
      %v886 = vpop.f32.mrf.mxu0
      %v887 = vadd.f32 %v795, %v886
      %v888 = vpop.f32.mrf.mxu0
      %v889 = vpop.f32.mrf.mxu0
      %v890 = vadd.f32 %v795, %v889
      %v891 = vpop.f32.mrf.mxu0
      %892 = vmatprep.mubr.bf16.mxu0 0
      %893 = vmatmul.mubr.bf16.gmra.mxu0 %v759
      %v894 = vpop.f32.mrf.mxu0
      %v895 = vadd.f32 %v795, %v894
      %v896 = vpop.f32.mrf.mxu0
      %v897 = vpop.f32.mrf.mxu0
      %v898 = vadd.f32 %v795, %v897
      %v899 = vpop.f32.mrf.mxu0
      %900 = vmatprep.mubr.bf16.mxu0 0
      %901 = vmatmul.mubr.bf16.gmra.mxu0 %v760
      %v902 = vpop.f32.mrf.mxu0
      %v903 = vadd.f32 %v795, %v902
      %v904 = vpop.f32.mrf.mxu0
      %v905 = vpop.f32.mrf.mxu0
      %v906 = vadd.f32 %v795, %v905
      %v907 = vpop.f32.mrf.mxu0
      %908 = vmatprep.mubr.bf16.mxu0 0
      %909 = vmatmul.mubr.bf16.gmra.mxu0 %v761
      %v910 = vpop.f32.mrf.mxu0
      %v911 = vadd.f32 %v795, %v910
      %v912 = vpop.f32.mrf.mxu0
      %v913 = vpop.f32.mrf.mxu0
      %v914 = vadd.f32 %v795, %v913
      %v915 = vpop.f32.mrf.mxu0
      %916 = vmatprep.mubr.bf16.mxu0 0
      %917 = vmatmul.mubr.bf16.gmra.mxu0 %v762
      %v918 = vpop.f32.mrf.mxu0
      %v919 = vadd.f32 %v795, %v918
      %v920 = vpop.f32.mrf.mxu0
      %v921 = vpop.f32.mrf.mxu0
      %v922 = vadd.f32 %v795, %v921
      %v923 = vpop.f32.mrf.mxu0
      %924 = vmatprep.mubr.bf16.mxu0 0
      %925 = vmatmul.mubr.bf16.gmra.mxu0 %v763
      %v926 = vpop.f32.mrf.mxu0
      %v927 = vadd.f32 %v795, %v926
      %v928 = vpop.f32.mrf.mxu0
      %v929 = vpop.f32.mrf.mxu0
      %v930 = vadd.f32 %v795, %v929
      %v931 = vpop.f32.mrf.mxu0
      %932 = vmatprep.mubr.bf16.mxu0 0
      %933 = vmatmul.mubr.bf16.gmra.mxu0 %v764
      %v934 = vpop.f32.mrf.mxu0
      %v935 = vadd.f32 %v795, %v934
      %v936 = vpop.f32.mrf.mxu0
      %v937 = vpop.f32.mrf.mxu0
      %v938 = vadd.f32 %v795, %v937
      %v939 = vpop.f32.mrf.mxu0
      %940 = vmatprep.mubr.bf16.mxu0 0
      %941 = vmatmul.mubr.bf16.gmra.mxu0 %v765
      %v942 = vpop.f32.mrf.mxu0
      %v943 = vadd.f32 %v795, %v942
      %v944 = vpop.f32.mrf.mxu0
      %v945 = vpop.f32.mrf.mxu0
      %v946 = vadd.f32 %v795, %v945
      %v947 = vpop.f32.mrf.mxu0
      %948 = vmatprep.mubr.bf16.mxu0 0
      %949 = vmatmul.mubr.bf16.gmra.mxu0 %v766
      %v950 = vpop.f32.mrf.mxu0
      %v951 = vadd.f32 %v795, %v950
      %v952 = vpop.f32.mrf.mxu0
      %v953 = vpop.f32.mrf.mxu0
      %v954 = vadd.f32 %v795, %v953
      %v955 = vpop.f32.mrf.mxu0
      %956 = vmatprep.mubr.bf16.mxu0 0
      %957 = vmatmul.mubr.bf16.gmra.mxu0 %v767
      %v958 = vpop.f32.mrf.mxu0
      %v959 = vadd.f32 %v795, %v958
      %v960 = vpop.f32.mrf.mxu0
      %v961 = vpop.f32.mrf.mxu0
      %v962 = vadd.f32 %v795, %v961
      %v963 = vpop.f32.mrf.mxu0
      %964 = vmatprep.mubr.bf16.mxu0 0
      %965 = vmatmul.mubr.bf16.gmra.mxu0 %v768
      %v966 = vpop.f32.mrf.mxu0
      %v967 = vadd.f32 %v795, %v966
      %v968 = vpop.f32.mrf.mxu0
      %v969 = vpop.f32.mrf.mxu0
      %v970 = vadd.f32 %v795, %v969
      %v971 = vpop.f32.mrf.mxu0
      %972 = vmatprep.mubr.bf16.mxu0 0
      %973 = vmatmul.mubr.bf16.gmra.mxu0 %v769
      %v974 = vpop.f32.mrf.mxu0
      %v975 = vadd.f32 %v795, %v974
      %v976 = vpop.f32.mrf.mxu0
      %v977 = vpop.f32.mrf.mxu0
      %v978 = vadd.f32 %v795, %v977
      %v979 = vpop.f32.mrf.mxu0
      %980 = vmatprep.mubr.bf16.mxu0 0
      %981 = vmatmul.mubr.bf16.gmra.mxu0 %v770
      %v982 = vpop.f32.mrf.mxu0
      %v983 = vadd.f32 %v795, %v982
      %v984 = vpop.f32.mrf.mxu0
      %v985 = vpop.f32.mrf.mxu0
      %v986 = vadd.f32 %v795, %v985
      %v987 = vpop.f32.mrf.mxu0
      %988 = vmatprep.mubr.bf16.mxu0 0
      %989 = vmatmul.mubr.bf16.gmra.mxu0 %v771
      %v990 = vpop.f32.mrf.mxu0
      %v991 = vadd.f32 %v795, %v990
      %v992 = vpop.f32.mrf.mxu0
      %v993 = vpop.f32.mrf.mxu0
      %v994 = vadd.f32 %v795, %v993
      %v995 = vpop.f32.mrf.mxu0
      %996 = vmatprep.mubr.bf16.mxu0 0
      %997 = vmatmul.mubr.bf16.gmra.mxu0 %v772
      %v998 = vpop.f32.mrf.mxu0
      %v999 = vadd.f32 %v795, %v998
      %v1000 = vpop.f32.mrf.mxu0
      %v1001 = vpop.f32.mrf.mxu0
      %v1002 = vadd.f32 %v795, %v1001
      %v1003 = vpop.f32.mrf.mxu0
      %1004 = vmatprep.mubr.bf16.mxu0 0
      %1005 = vmatmul.mubr.bf16.gmra.mxu0 %v773
      %v1006 = vpop.f32.mrf.mxu0
      %v1007 = vadd.f32 %v795, %v1006
      %v1008 = vpop.f32.mrf.mxu0
      %v1009 = vpop.f32.mrf.mxu0
      %v1010 = vadd.f32 %v795, %v1009
      %v1011 = vpop.f32.mrf.mxu0
      %1012 = vmatprep.mubr.bf16.mxu0 0
      %1013 = vmatmul.mubr.bf16.gmra.mxu0 %v774
      %v1014 = vpop.f32.mrf.mxu0
      %v1015 = vadd.f32 %v795, %v1014
      %v1016 = vpop.f32.mrf.mxu0
      %v1017 = vpop.f32.mrf.mxu0
      %v1018 = vadd.f32 %v795, %v1017
      %v1019 = vpop.f32.mrf.mxu0
      %1020 = vmatprep.mubr.bf16.mxu0 0
      %1021 = vmatmul.mubr.bf16.gmra.mxu0 %v775
      %v1022 = vpop.f32.mrf.mxu0
      %v1023 = vadd.f32 %v795, %v1022
      %v1024 = vpop.f32.mrf.mxu0
      %v1025 = vpop.f32.mrf.mxu0
      %v1026 = vadd.f32 %v795, %v1025
      %v1027 = vpop.f32.mrf.mxu0
      %1028 = vdwg.mxu0
      %v1029 = vmax.f32 %v879, 0.0
      %v1030 = vmax.f32 %v882, 0.0
      %v1031 = vmax.f32 %v887, 0.0
      %v1032 = vmax.f32 %v890, 0.0
      %v1033 = vmax.f32 %v895, 0.0
      %v1034 = vmax.f32 %v898, 0.0
      %v1035 = vmax.f32 %v903, 0.0
      %v1036 = vmax.f32 %v906, 0.0
      %v1037 = vmax.f32 %v911, 0.0
      %v1038 = vmax.f32 %v914, 0.0
      %v1039 = vmax.f32 %v919, 0.0
      %v1040 = vmax.f32 %v922, 0.0
      %v1041 = vmax.f32 %v927, 0.0
      %v1042 = vmax.f32 %v930, 0.0
      %v1043 = vmax.f32 %v935, 0.0
      %v1044 = vmax.f32 %v938, 0.0
      %v1045 = vmax.f32 %v943, 0.0
      %v1046 = vmax.f32 %v946, 0.0
      %v1047 = vmax.f32 %v951, 0.0
      %v1048 = vmax.f32 %v954, 0.0
      %v1049 = vmax.f32 %v959, 0.0
      %v1050 = vmax.f32 %v962, 0.0
      %v1051 = vmax.f32 %v967, 0.0
      %v1052 = vmax.f32 %v970, 0.0
      %v1053 = vmax.f32 %v975, 0.0
      %v1054 = vmax.f32 %v978, 0.0
      %v1055 = vmax.f32 %v983, 0.0
      %v1056 = vmax.f32 %v986, 0.0
      %v1057 = vmax.f32 %v991, 0.0
      %v1058 = vmax.f32 %v994, 0.0
      %v1059 = vmax.f32 %v999, 0.0
      %v1060 = vmax.f32 %v1002, 0.0
      %v1061 = vmax.f32 %v1007, 0.0
      %v1062 = vmax.f32 %v1010, 0.0
      %v1063 = vmax.f32 %v1015, 0.0
      %v1064 = vmax.f32 %v1018, 0.0
      %v1065 = vmax.f32 %v1023, 0.0
      %v1066 = vmax.f32 %v1026, 0.0
      %v1067 = vpack.c.bf16 %v1030, %v1029
      %v1068 = vpack.c.bf16 %v1032, %v1031
      %v1069 = vpack.c.bf16 %v1034, %v1033
      %v1070 = vpack.c.bf16 %v1036, %v1035
      %v1071 = vpack.c.bf16 %v1038, %v1037
      %v1072 = vpack.c.bf16 %v1040, %v1039
      %v1073 = vpack.c.bf16 %v1042, %v1041
      %v1074 = vpack.c.bf16 %v1044, %v1043
      %v1075 = vpack.c.bf16 %v1046, %v1045
      %v1076 = vpack.c.bf16 %v1048, %v1047
      %v1077 = vpack.c.bf16 %v1050, %v1049
      %v1078 = vpack.c.bf16 %v1052, %v1051
      %v1079 = vpack.c.bf16 %v1054, %v1053
      %v1080 = vpack.c.bf16 %v1056, %v1055
      %v1081 = vpack.c.bf16 %v1058, %v1057
      %v1082 = vpack.c.bf16 %v1060, %v1059
      %v1083 = vpack.c.bf16 %v1062, %v1061
      %v1084 = vpack.c.bf16 %v1064, %v1063
      %v1085 = vpack.c.bf16 %v1066, %v1065
      %v1086 = vld [vmem:[%s3] sm:$0xf]
      %v1087 = vld [vmem:[%s3 + $0x4] sm:$0xf]
      %v1088 = vld [vmem:[%s3 + $0x8] sm:$0xf]
      %v1089 = vld [vmem:[%s3 + $0xc] sm:$0xf]
      %v1090 = vld [vmem:[%s3 + $0x10] sm:$0xf]
      %v1091 = vld [vmem:[%s3 + $0x14] sm:$0xf]
      %v1092 = vld [vmem:[%s3 + $0x18] sm:$0xf]
      %v1093 = vld [vmem:[%s3 + $0x1c] sm:$0xf]
      %v1094 = vlaneseq
      %v1095 = vshrl.u32 %v1094, 7
      %v1096 = vsub.s32 0, %v1095
      %v1097 = vrot.slane %v312, %v1096
      %v1106 = vunpack.c.l.b16 %v1086
      %v1107 = vunpack.c.l.b16 %v1087
      %v1108 = vunpack.c.l.b16 %v1088
      %v1109 = vunpack.c.l.b16 %v1089
      %v1110 = vunpack.c.l.b16 %v1090
      %v1111 = vunpack.c.l.b16 %v1091
      %v1112 = vunpack.c.l.b16 %v1092
      %v1113 = vunpack.c.l.b16 %v1093
      %v1114 = vpack.c.b16 %v1107, %v1106
      %v1115 = vpack.c.b16 %v1109, %v1108
      %v1116 = vpack.c.b16 %v1111, %v1110
      %v1117 = vpack.c.b16 %v1113, %v1112
      %vm1122 = vcmask 523264
      %v1124 = vsel %vm1122, %v1067, 0
      %v1127 = vsel %vm1122, %v1068, 0
      %v1130 = vsel %vm1122, %v1069, 0
      %v1133 = vsel %vm1122, %v1070, 0
      %v1136 = vsel %vm1122, %v1071, 0
      %v1139 = vsel %vm1122, %v1072, 0
      %v1142 = vsel %vm1122, %v1073, 0
      %v1145 = vsel %vm1122, %v1074, 0
      %v1148 = vsel %vm1122, %v1075, 0
      %v1151 = vsel %vm1122, %v1076, 0
      %v1154 = vsel %vm1122, %v1077, 0
      %v1157 = vsel %vm1122, %v1078, 0
      %v1160 = vsel %vm1122, %v1079, 0
      %v1163 = vsel %vm1122, %v1080, 0
      %v1166 = vsel %vm1122, %v1081, 0
      %v1169 = vsel %vm1122, %v1082, 0
      %v1172 = vsel %vm1122, %v1083, 0
      %v1175 = vsel %vm1122, %v1084, 0
      %v1178 = vsel %vm1122, %v1085, 0
      %1180 = vmatprep.subr.bf16.mxu0 0
      %1181 = vmatpush1.bf16.msra.mxu0 0
      %1182 = vmatprep.subr.bf16.mxu0 0
      %1183 = vmatpush1.bf16.msra.mxu0 0
      %1184 = vmatprep.subr.bf16.mxu0 0
      %1185 = vmatpush1.bf16.msra.mxu0 0
      %1186 = vmatprep.subr.bf16.mxu0 0
      %1187 = vmatpush1.bf16.msra.mxu0 0
      %1188 = vmatprep.subr.bf16.mxu0 0
      %1189 = vmatpush1.bf16.msra.mxu0 %v1117
      %1190 = vmatprep.subr.bf16.mxu0 0
      %1191 = vmatpush1.bf16.msra.mxu0 %v1116
      %1192 = vmatprep.subr.bf16.mxu0 0
      %1193 = vmatpush1.bf16.msra.mxu0 %v1115
      %1194 = vmatprep.subr.bf16.mxu0 0
      %1195 = vmatpush1.bf16.msra.mxu0 %v1114
      %1196 = vmatprep.subr.bf16.mxu0 0
      %1197 = vmatpush2.bf16.msra.mxu0 0
      %1198 = vmatprep.subr.bf16.mxu0 0
      %1199 = vmatpush2.bf16.msra.mxu0 0
      %1200 = vmatprep.subr.bf16.mxu0 0
      %1201 = vmatpush2.bf16.msra.mxu0 0
      %1202 = vmatprep.subr.bf16.mxu0 0
      %1203 = vmatpush2.bf16.msra.mxu0 0
      %1204 = vmatprep.subr.bf16.mxu0 0
      %1205 = vmatpush2.bf16.msra.mxu0 0
      %1206 = vmatprep.subr.bf16.mxu0 0
      %1207 = vmatpush2.bf16.msra.mxu0 0
      %1208 = vmatprep.subr.bf16.mxu0 0
      %1209 = vmatpush2.bf16.msra.mxu0 0
      %1210 = vmatprep.subr.bf16.mxu0 0
      %1211 = vmatpush2.bf16.msra.mxu0 0
      %1212 = vmatprep.mubr.bf16.mxu0 0
      %1213 = vmatmul.mubr.bf16.gmra.mxu0 %v1124
      %v1214 = vpop.f32.mrf.mxu0
      %v1215 = vadd.f32 %v1097, %v1214
      %v1216 = vpop.f32.mrf.mxu0
      %v1217 = vpop.f32.mrf.mxu0
      %v1218 = vadd.f32 %v1097, %v1217
      %v1219 = vpop.f32.mrf.mxu0
      %1220 = vmatprep.mubr.bf16.mxu0 0
      %1221 = vmatmul.mubr.bf16.gmra.mxu0 %v1127
      %v1222 = vpop.f32.mrf.mxu0
      %v1223 = vadd.f32 %v1097, %v1222
      %v1224 = vpop.f32.mrf.mxu0
      %v1225 = vpop.f32.mrf.mxu0
      %v1226 = vadd.f32 %v1097, %v1225
      %v1227 = vpop.f32.mrf.mxu0
      %1228 = vmatprep.mubr.bf16.mxu0 0
      %1229 = vmatmul.mubr.bf16.gmra.mxu0 %v1130
      %v1230 = vpop.f32.mrf.mxu0
      %v1231 = vadd.f32 %v1097, %v1230
      %v1232 = vpop.f32.mrf.mxu0
      %v1233 = vpop.f32.mrf.mxu0
      %v1234 = vadd.f32 %v1097, %v1233
      %v1235 = vpop.f32.mrf.mxu0
      %1236 = vmatprep.mubr.bf16.mxu0 0
      %1237 = vmatmul.mubr.bf16.gmra.mxu0 %v1133
      %v1238 = vpop.f32.mrf.mxu0
      %v1239 = vadd.f32 %v1097, %v1238
      %v1240 = vpop.f32.mrf.mxu0
      %v1241 = vpop.f32.mrf.mxu0
      %v1242 = vadd.f32 %v1097, %v1241
      %v1243 = vpop.f32.mrf.mxu0
      %1244 = vmatprep.mubr.bf16.mxu0 0
      %1245 = vmatmul.mubr.bf16.gmra.mxu0 %v1136
      %v1246 = vpop.f32.mrf.mxu0
      %v1247 = vadd.f32 %v1097, %v1246
      %v1248 = vpop.f32.mrf.mxu0
      %v1249 = vpop.f32.mrf.mxu0
      %v1250 = vadd.f32 %v1097, %v1249
      %v1251 = vpop.f32.mrf.mxu0
      %1252 = vmatprep.mubr.bf16.mxu0 0
      %1253 = vmatmul.mubr.bf16.gmra.mxu0 %v1139
      %v1254 = vpop.f32.mrf.mxu0
      %v1255 = vadd.f32 %v1097, %v1254
      %v1256 = vpop.f32.mrf.mxu0
      %v1257 = vpop.f32.mrf.mxu0
      %v1258 = vadd.f32 %v1097, %v1257
      %v1259 = vpop.f32.mrf.mxu0
      %1260 = vmatprep.mubr.bf16.mxu0 0
      %1261 = vmatmul.mubr.bf16.gmra.mxu0 %v1142
      %v1262 = vpop.f32.mrf.mxu0
      %v1263 = vadd.f32 %v1097, %v1262
      %v1264 = vpop.f32.mrf.mxu0
      %v1265 = vpop.f32.mrf.mxu0
      %v1266 = vadd.f32 %v1097, %v1265
      %v1267 = vpop.f32.mrf.mxu0
      %1268 = vmatprep.mubr.bf16.mxu0 0
      %1269 = vmatmul.mubr.bf16.gmra.mxu0 %v1145
      %v1270 = vpop.f32.mrf.mxu0
      %v1271 = vadd.f32 %v1097, %v1270
      %v1272 = vpop.f32.mrf.mxu0
      %v1273 = vpop.f32.mrf.mxu0
      %v1274 = vadd.f32 %v1097, %v1273
      %v1275 = vpop.f32.mrf.mxu0
      %1276 = vmatprep.mubr.bf16.mxu0 0
      %1277 = vmatmul.mubr.bf16.gmra.mxu0 %v1148
      %v1278 = vpop.f32.mrf.mxu0
      %v1279 = vadd.f32 %v1097, %v1278
      %v1280 = vpop.f32.mrf.mxu0
      %v1281 = vpop.f32.mrf.mxu0
      %v1282 = vadd.f32 %v1097, %v1281
      %v1283 = vpop.f32.mrf.mxu0
      %1284 = vmatprep.mubr.bf16.mxu0 0
      %1285 = vmatmul.mubr.bf16.gmra.mxu0 %v1151
      %v1286 = vpop.f32.mrf.mxu0
      %v1287 = vadd.f32 %v1097, %v1286
      %v1288 = vpop.f32.mrf.mxu0
      %v1289 = vpop.f32.mrf.mxu0
      %v1290 = vadd.f32 %v1097, %v1289
      %v1291 = vpop.f32.mrf.mxu0
      %1292 = vmatprep.mubr.bf16.mxu0 0
      %1293 = vmatmul.mubr.bf16.gmra.mxu0 %v1154
      %v1294 = vpop.f32.mrf.mxu0
      %v1295 = vadd.f32 %v1097, %v1294
      %v1296 = vpop.f32.mrf.mxu0
      %v1297 = vpop.f32.mrf.mxu0
      %v1298 = vadd.f32 %v1097, %v1297
      %v1299 = vpop.f32.mrf.mxu0
      %1300 = vmatprep.mubr.bf16.mxu0 0
      %1301 = vmatmul.mubr.bf16.gmra.mxu0 %v1157
      %v1302 = vpop.f32.mrf.mxu0
      %v1303 = vadd.f32 %v1097, %v1302
      %v1304 = vpop.f32.mrf.mxu0
      %v1305 = vpop.f32.mrf.mxu0
      %v1306 = vadd.f32 %v1097, %v1305
      %v1307 = vpop.f32.mrf.mxu0
      %1308 = vmatprep.mubr.bf16.mxu0 0
      %1309 = vmatmul.mubr.bf16.gmra.mxu0 %v1160
      %v1310 = vpop.f32.mrf.mxu0
      %v1311 = vadd.f32 %v1097, %v1310
      %v1312 = vpop.f32.mrf.mxu0
      %v1313 = vpop.f32.mrf.mxu0
      %v1314 = vadd.f32 %v1097, %v1313
      %v1315 = vpop.f32.mrf.mxu0
      %1316 = vmatprep.mubr.bf16.mxu0 0
      %1317 = vmatmul.mubr.bf16.gmra.mxu0 %v1163
      %v1318 = vpop.f32.mrf.mxu0
      %v1319 = vadd.f32 %v1097, %v1318
      %v1320 = vpop.f32.mrf.mxu0
      %v1321 = vpop.f32.mrf.mxu0
      %v1322 = vadd.f32 %v1097, %v1321
      %v1323 = vpop.f32.mrf.mxu0
      %1324 = vmatprep.mubr.bf16.mxu0 0
      %1325 = vmatmul.mubr.bf16.gmra.mxu0 %v1166
      %v1326 = vpop.f32.mrf.mxu0
      %v1327 = vadd.f32 %v1097, %v1326
      %v1328 = vpop.f32.mrf.mxu0
      %v1329 = vpop.f32.mrf.mxu0
      %v1330 = vadd.f32 %v1097, %v1329
      %v1331 = vpop.f32.mrf.mxu0
      %1332 = vmatprep.mubr.bf16.mxu0 0
      %1333 = vmatmul.mubr.bf16.gmra.mxu0 %v1169
      %v1334 = vpop.f32.mrf.mxu0
      %v1335 = vadd.f32 %v1097, %v1334
      %v1336 = vpop.f32.mrf.mxu0
      %v1337 = vpop.f32.mrf.mxu0
      %v1338 = vadd.f32 %v1097, %v1337
      %v1339 = vpop.f32.mrf.mxu0
      %1340 = vmatprep.mubr.bf16.mxu0 0
      %1341 = vmatmul.mubr.bf16.gmra.mxu0 %v1172
      %v1342 = vpop.f32.mrf.mxu0
      %v1343 = vadd.f32 %v1097, %v1342
      %v1344 = vpop.f32.mrf.mxu0
      %v1345 = vpop.f32.mrf.mxu0
      %v1346 = vadd.f32 %v1097, %v1345
      %v1347 = vpop.f32.mrf.mxu0
      %1348 = vmatprep.mubr.bf16.mxu0 0
      %1349 = vmatmul.mubr.bf16.gmra.mxu0 %v1175
      %v1350 = vpop.f32.mrf.mxu0
      %v1351 = vadd.f32 %v1097, %v1350
      %v1352 = vpop.f32.mrf.mxu0
      %v1353 = vpop.f32.mrf.mxu0
      %v1354 = vadd.f32 %v1097, %v1353
      %v1355 = vpop.f32.mrf.mxu0
      %1356 = vmatprep.mubr.bf16.mxu0 0
      %1357 = vmatmul.mubr.bf16.gmra.mxu0 %v1178
      %v1358 = vpop.f32.mrf.mxu0
      %v1359 = vadd.f32 %v1097, %v1358
      %v1360 = vpop.f32.mrf.mxu0
      %v1361 = vpop.f32.mrf.mxu0
      %v1362 = vadd.f32 %v1097, %v1361
      %v1363 = vpop.f32.mrf.mxu0
      %1364 = vdwg.mxu0
      %v1365 = vmax.f32 %v1215, 0.0
      %v1366 = vmax.f32 %v1218, 0.0
      %v1367 = vmax.f32 %v1223, 0.0
      %v1368 = vmax.f32 %v1226, 0.0
      %v1369 = vmax.f32 %v1231, 0.0
      %v1370 = vmax.f32 %v1234, 0.0
      %v1371 = vmax.f32 %v1239, 0.0
      %v1372 = vmax.f32 %v1242, 0.0
      %v1373 = vmax.f32 %v1247, 0.0
      %v1374 = vmax.f32 %v1250, 0.0
      %v1375 = vmax.f32 %v1255, 0.0
      %v1376 = vmax.f32 %v1258, 0.0
      %v1377 = vmax.f32 %v1263, 0.0
      %v1378 = vmax.f32 %v1266, 0.0
      %v1379 = vmax.f32 %v1271, 0.0
      %v1380 = vmax.f32 %v1274, 0.0
      %v1381 = vmax.f32 %v1279, 0.0
      %v1382 = vmax.f32 %v1282, 0.0
      %v1383 = vmax.f32 %v1287, 0.0
      %v1384 = vmax.f32 %v1290, 0.0
      %v1385 = vmax.f32 %v1295, 0.0
      %v1386 = vmax.f32 %v1298, 0.0
      %v1387 = vmax.f32 %v1303, 0.0
      %v1388 = vmax.f32 %v1306, 0.0
      %v1389 = vmax.f32 %v1311, 0.0
      %v1390 = vmax.f32 %v1314, 0.0
      %v1391 = vmax.f32 %v1319, 0.0
      %v1392 = vmax.f32 %v1322, 0.0
      %v1393 = vmax.f32 %v1327, 0.0
      %v1394 = vmax.f32 %v1330, 0.0
      %v1395 = vmax.f32 %v1335, 0.0
      %v1396 = vmax.f32 %v1338, 0.0
      %v1397 = vmax.f32 %v1343, 0.0
      %v1398 = vmax.f32 %v1346, 0.0
      %v1399 = vmax.f32 %v1351, 0.0
      %v1400 = vmax.f32 %v1354, 0.0
      %v1401 = vmax.f32 %v1359, 0.0
      %v1402 = vmax.f32 %v1362, 0.0
      %v1403 = vpack.c.bf16 %v1366, %v1365
      %v1404 = vpack.c.bf16 %v1368, %v1367
      %v1405 = vpack.c.bf16 %v1370, %v1369
      %v1406 = vpack.c.bf16 %v1372, %v1371
      %v1407 = vpack.c.bf16 %v1374, %v1373
      %v1408 = vpack.c.bf16 %v1376, %v1375
      %v1409 = vpack.c.bf16 %v1378, %v1377
      %v1410 = vpack.c.bf16 %v1380, %v1379
      %v1411 = vpack.c.bf16 %v1382, %v1381
      %v1412 = vpack.c.bf16 %v1384, %v1383
      %v1413 = vpack.c.bf16 %v1386, %v1385
      %v1414 = vpack.c.bf16 %v1388, %v1387
      %v1415 = vpack.c.bf16 %v1390, %v1389
      %v1416 = vpack.c.bf16 %v1392, %v1391
      %v1417 = vpack.c.bf16 %v1394, %v1393
      %v1418 = vpack.c.bf16 %v1396, %v1395
      %v1419 = vpack.c.bf16 %v1398, %v1397
      %v1420 = vpack.c.bf16 %v1400, %v1399
      %v1421 = vpack.c.bf16 %v1402, %v1401
      %v1422 = vld [vmem:[%s4] sm:$0xf]
      %v1423 = vld [vmem:[%s4 + $0x4] sm:$0xf]
      %v1424 = vld [vmem:[%s4 + $0x8] sm:$0xf]
      %v1425 = vld [vmem:[%s4 + $0xc] sm:$0xf]
      %v1426 = vld [vmem:[%s4 + $0x10] sm:$0xf]
      %v1427 = vld [vmem:[%s4 + $0x14] sm:$0xf]
      %v1428 = vld [vmem:[%s4 + $0x18] sm:$0xf]
      %v1429 = vld [vmem:[%s4 + $0x1c] sm:$0xf]
      %v1430 = vlaneseq
      %v1431 = vshrl.u32 %v1430, 7
      %v1432 = vsub.s32 0, %v1431
      %v1433 = vrot.slane %v313, %v1432
      %v1442 = vunpack.c.l.b16 %v1422
      %v1443 = vunpack.c.l.b16 %v1423
      %v1444 = vunpack.c.l.b16 %v1424
      %v1445 = vunpack.c.l.b16 %v1425
      %v1446 = vunpack.c.l.b16 %v1426
      %v1447 = vunpack.c.l.b16 %v1427
      %v1448 = vunpack.c.l.b16 %v1428
      %v1449 = vunpack.c.l.b16 %v1429
      %v1450 = vpack.c.b16 %v1443, %v1442
      %v1451 = vpack.c.b16 %v1445, %v1444
      %v1452 = vpack.c.b16 %v1447, %v1446
      %v1453 = vpack.c.b16 %v1449, %v1448
      %v1459 = vsel %vm1122, %v1403, 0
      %v1462 = vsel %vm1122, %v1404, 0
      %v1465 = vsel %vm1122, %v1405, 0
      %v1468 = vsel %vm1122, %v1406, 0
      %v1471 = vsel %vm1122, %v1407, 0
      %v1474 = vsel %vm1122, %v1408, 0
      %v1477 = vsel %vm1122, %v1409, 0
      %v1480 = vsel %vm1122, %v1410, 0
      %v1483 = vsel %vm1122, %v1411, 0
      %v1486 = vsel %vm1122, %v1412, 0
      %v1489 = vsel %vm1122, %v1413, 0
      %v1492 = vsel %vm1122, %v1414, 0
      %v1495 = vsel %vm1122, %v1415, 0
      %v1498 = vsel %vm1122, %v1416, 0
      %v1501 = vsel %vm1122, %v1417, 0
      %v1504 = vsel %vm1122, %v1418, 0
      %v1507 = vsel %vm1122, %v1419, 0
      %v1510 = vsel %vm1122, %v1420, 0
      %v1513 = vsel %vm1122, %v1421, 0
      %1515 = vmatprep.subr.bf16.mxu0 0
      %1516 = vmatpush1.bf16.msra.mxu0 0
      %1517 = vmatprep.subr.bf16.mxu0 0
      %1518 = vmatpush1.bf16.msra.mxu0 0
      %1519 = vmatprep.subr.bf16.mxu0 0
      %1520 = vmatpush1.bf16.msra.mxu0 0
      %1521 = vmatprep.subr.bf16.mxu0 0
      %1522 = vmatpush1.bf16.msra.mxu0 0
      %1523 = vmatprep.subr.bf16.mxu0 0
      %1524 = vmatpush1.bf16.msra.mxu0 %v1453
      %1525 = vmatprep.subr.bf16.mxu0 0
      %1526 = vmatpush1.bf16.msra.mxu0 %v1452
      %1527 = vmatprep.subr.bf16.mxu0 0
      %1528 = vmatpush1.bf16.msra.mxu0 %v1451
      %1529 = vmatprep.subr.bf16.mxu0 0
      %1530 = vmatpush1.bf16.msra.mxu0 %v1450
      %1531 = vmatprep.subr.bf16.mxu0 0
      %1532 = vmatpush2.bf16.msra.mxu0 0
      %1533 = vmatprep.subr.bf16.mxu0 0
      %1534 = vmatpush2.bf16.msra.mxu0 0
      %1535 = vmatprep.subr.bf16.mxu0 0
      %1536 = vmatpush2.bf16.msra.mxu0 0
      %1537 = vmatprep.subr.bf16.mxu0 0
      %1538 = vmatpush2.bf16.msra.mxu0 0
      %1539 = vmatprep.subr.bf16.mxu0 0
      %1540 = vmatpush2.bf16.msra.mxu0 0
      %1541 = vmatprep.subr.bf16.mxu0 0
      %1542 = vmatpush2.bf16.msra.mxu0 0
      %1543 = vmatprep.subr.bf16.mxu0 0
      %1544 = vmatpush2.bf16.msra.mxu0 0
      %1545 = vmatprep.subr.bf16.mxu0 0
      %1546 = vmatpush2.bf16.msra.mxu0 0
      %1547 = vmatprep.mubr.bf16.mxu0 0
      %1548 = vmatmul.mubr.bf16.gmra.mxu0 %v1459
      %v1549 = vpop.f32.mrf.mxu0
      %v1550 = vadd.f32 %v1433, %v1549
      %v1551 = vpop.f32.mrf.mxu0
      %v1552 = vpop.f32.mrf.mxu0
      %v1553 = vadd.f32 %v1433, %v1552
      %v1554 = vpop.f32.mrf.mxu0
      %1555 = vmatprep.mubr.bf16.mxu0 0
      %1556 = vmatmul.mubr.bf16.gmra.mxu0 %v1462
      %v1557 = vpop.f32.mrf.mxu0
      %v1558 = vadd.f32 %v1433, %v1557
      %v1559 = vpop.f32.mrf.mxu0
      %v1560 = vpop.f32.mrf.mxu0
      %v1561 = vadd.f32 %v1433, %v1560
      %v1562 = vpop.f32.mrf.mxu0
      %1563 = vmatprep.mubr.bf16.mxu0 0
      %1564 = vmatmul.mubr.bf16.gmra.mxu0 %v1465
      %v1565 = vpop.f32.mrf.mxu0
      %v1566 = vadd.f32 %v1433, %v1565
      %v1567 = vpop.f32.mrf.mxu0
      %v1568 = vpop.f32.mrf.mxu0
      %v1569 = vadd.f32 %v1433, %v1568
      %v1570 = vpop.f32.mrf.mxu0
      %1571 = vmatprep.mubr.bf16.mxu0 0
      %1572 = vmatmul.mubr.bf16.gmra.mxu0 %v1468
      %v1573 = vpop.f32.mrf.mxu0
      %v1574 = vadd.f32 %v1433, %v1573
      %v1575 = vpop.f32.mrf.mxu0
      %v1576 = vpop.f32.mrf.mxu0
      %v1577 = vadd.f32 %v1433, %v1576
      %v1578 = vpop.f32.mrf.mxu0
      %1579 = vmatprep.mubr.bf16.mxu0 0
      %1580 = vmatmul.mubr.bf16.gmra.mxu0 %v1471
      %v1581 = vpop.f32.mrf.mxu0
      %v1582 = vadd.f32 %v1433, %v1581
      %v1583 = vpop.f32.mrf.mxu0
      %v1584 = vpop.f32.mrf.mxu0
      %v1585 = vadd.f32 %v1433, %v1584
      %v1586 = vpop.f32.mrf.mxu0
      %1587 = vmatprep.mubr.bf16.mxu0 0
      %1588 = vmatmul.mubr.bf16.gmra.mxu0 %v1474
      %v1589 = vpop.f32.mrf.mxu0
      %v1590 = vadd.f32 %v1433, %v1589
      %v1591 = vpop.f32.mrf.mxu0
      %v1592 = vpop.f32.mrf.mxu0
      %v1593 = vadd.f32 %v1433, %v1592
      %v1594 = vpop.f32.mrf.mxu0
      %1595 = vmatprep.mubr.bf16.mxu0 0
      %1596 = vmatmul.mubr.bf16.gmra.mxu0 %v1477
      %v1597 = vpop.f32.mrf.mxu0
      %v1598 = vadd.f32 %v1433, %v1597
      %v1599 = vpop.f32.mrf.mxu0
      %v1600 = vpop.f32.mrf.mxu0
      %v1601 = vadd.f32 %v1433, %v1600
      %v1602 = vpop.f32.mrf.mxu0
      %1603 = vmatprep.mubr.bf16.mxu0 0
      %1604 = vmatmul.mubr.bf16.gmra.mxu0 %v1480
      %v1605 = vpop.f32.mrf.mxu0
      %v1606 = vadd.f32 %v1433, %v1605
      %v1607 = vpop.f32.mrf.mxu0
      %v1608 = vpop.f32.mrf.mxu0
      %v1609 = vadd.f32 %v1433, %v1608
      %v1610 = vpop.f32.mrf.mxu0
      %1611 = vmatprep.mubr.bf16.mxu0 0
      %1612 = vmatmul.mubr.bf16.gmra.mxu0 %v1483
      %v1613 = vpop.f32.mrf.mxu0
      %v1614 = vadd.f32 %v1433, %v1613
      %v1615 = vpop.f32.mrf.mxu0
      %v1616 = vpop.f32.mrf.mxu0
      %v1617 = vadd.f32 %v1433, %v1616
      %v1618 = vpop.f32.mrf.mxu0
      %1619 = vmatprep.mubr.bf16.mxu0 0
      %1620 = vmatmul.mubr.bf16.gmra.mxu0 %v1486
      %v1621 = vpop.f32.mrf.mxu0
      %v1622 = vadd.f32 %v1433, %v1621
      %v1623 = vpop.f32.mrf.mxu0
      %v1624 = vpop.f32.mrf.mxu0
      %v1625 = vadd.f32 %v1433, %v1624
      %v1626 = vpop.f32.mrf.mxu0
      %1627 = vmatprep.mubr.bf16.mxu0 0
      %1628 = vmatmul.mubr.bf16.gmra.mxu0 %v1489
      %v1629 = vpop.f32.mrf.mxu0
      %v1630 = vadd.f32 %v1433, %v1629
      %v1631 = vpop.f32.mrf.mxu0
      %v1632 = vpop.f32.mrf.mxu0
      %v1633 = vadd.f32 %v1433, %v1632
      %v1634 = vpop.f32.mrf.mxu0
      %1635 = vmatprep.mubr.bf16.mxu0 0
      %1636 = vmatmul.mubr.bf16.gmra.mxu0 %v1492
      %v1637 = vpop.f32.mrf.mxu0
      %v1638 = vadd.f32 %v1433, %v1637
      %v1639 = vpop.f32.mrf.mxu0
      %v1640 = vpop.f32.mrf.mxu0
      %v1641 = vadd.f32 %v1433, %v1640
      %v1642 = vpop.f32.mrf.mxu0
      %1643 = vmatprep.mubr.bf16.mxu0 0
      %1644 = vmatmul.mubr.bf16.gmra.mxu0 %v1495
      %v1645 = vpop.f32.mrf.mxu0
      %v1646 = vadd.f32 %v1433, %v1645
      %v1647 = vpop.f32.mrf.mxu0
      %v1648 = vpop.f32.mrf.mxu0
      %v1649 = vadd.f32 %v1433, %v1648
      %v1650 = vpop.f32.mrf.mxu0
      %1651 = vmatprep.mubr.bf16.mxu0 0
      %1652 = vmatmul.mubr.bf16.gmra.mxu0 %v1498
      %v1653 = vpop.f32.mrf.mxu0
      %v1654 = vadd.f32 %v1433, %v1653
      %v1655 = vpop.f32.mrf.mxu0
      %v1656 = vpop.f32.mrf.mxu0
      %v1657 = vadd.f32 %v1433, %v1656
      %v1658 = vpop.f32.mrf.mxu0
      %1659 = vmatprep.mubr.bf16.mxu0 0
      %1660 = vmatmul.mubr.bf16.gmra.mxu0 %v1501
      %v1661 = vpop.f32.mrf.mxu0
      %v1662 = vadd.f32 %v1433, %v1661
      %v1663 = vpop.f32.mrf.mxu0
      %v1664 = vpop.f32.mrf.mxu0
      %v1665 = vadd.f32 %v1433, %v1664
      %v1666 = vpop.f32.mrf.mxu0
      %1667 = vmatprep.mubr.bf16.mxu0 0
      %1668 = vmatmul.mubr.bf16.gmra.mxu0 %v1504
      %v1669 = vpop.f32.mrf.mxu0
      %v1670 = vadd.f32 %v1433, %v1669
      %v1671 = vpop.f32.mrf.mxu0
      %v1672 = vpop.f32.mrf.mxu0
      %v1673 = vadd.f32 %v1433, %v1672
      %v1674 = vpop.f32.mrf.mxu0
      %1675 = vmatprep.mubr.bf16.mxu0 0
      %1676 = vmatmul.mubr.bf16.gmra.mxu0 %v1507
      %v1677 = vpop.f32.mrf.mxu0
      %v1678 = vadd.f32 %v1433, %v1677
      %v1679 = vpop.f32.mrf.mxu0
      %v1680 = vpop.f32.mrf.mxu0
      %v1681 = vadd.f32 %v1433, %v1680
      %v1682 = vpop.f32.mrf.mxu0
      %1683 = vmatprep.mubr.bf16.mxu0 0
      %1684 = vmatmul.mubr.bf16.gmra.mxu0 %v1510
      %v1685 = vpop.f32.mrf.mxu0
      %v1686 = vadd.f32 %v1433, %v1685
      %v1687 = vpop.f32.mrf.mxu0
      %v1688 = vpop.f32.mrf.mxu0
      %v1689 = vadd.f32 %v1433, %v1688
      %v1690 = vpop.f32.mrf.mxu0
      %1691 = vmatprep.mubr.bf16.mxu0 0
      %1692 = vmatmul.mubr.bf16.gmra.mxu0 %v1513
      %v1693 = vpop.f32.mrf.mxu0
      %v1694 = vadd.f32 %v1433, %v1693
      %v1695 = vpop.f32.mrf.mxu0
      %v1696 = vpop.f32.mrf.mxu0
      %v1697 = vadd.f32 %v1433, %v1696
      %v1698 = vpop.f32.mrf.mxu0
      %1699 = vdwg.mxu0
      %v1700 = vmax.f32 %v1550, 0.0
      %v1701 = vmax.f32 %v1553, 0.0
      %v1702 = vmax.f32 %v1558, 0.0
      %v1703 = vmax.f32 %v1561, 0.0
      %v1704 = vmax.f32 %v1566, 0.0
      %v1705 = vmax.f32 %v1569, 0.0
      %v1706 = vmax.f32 %v1574, 0.0
      %v1707 = vmax.f32 %v1577, 0.0
      %v1708 = vmax.f32 %v1582, 0.0
      %v1709 = vmax.f32 %v1585, 0.0
      %v1710 = vmax.f32 %v1590, 0.0
      %v1711 = vmax.f32 %v1593, 0.0
      %v1712 = vmax.f32 %v1598, 0.0
      %v1713 = vmax.f32 %v1601, 0.0
      %v1714 = vmax.f32 %v1606, 0.0
      %v1715 = vmax.f32 %v1609, 0.0
      %v1716 = vmax.f32 %v1614, 0.0
      %v1717 = vmax.f32 %v1617, 0.0
      %v1718 = vmax.f32 %v1622, 0.0
      %v1719 = vmax.f32 %v1625, 0.0
      %v1720 = vmax.f32 %v1630, 0.0
      %v1721 = vmax.f32 %v1633, 0.0
      %v1722 = vmax.f32 %v1638, 0.0
      %v1723 = vmax.f32 %v1641, 0.0
      %v1724 = vmax.f32 %v1646, 0.0
      %v1725 = vmax.f32 %v1649, 0.0
      %v1726 = vmax.f32 %v1654, 0.0
      %v1727 = vmax.f32 %v1657, 0.0
      %v1728 = vmax.f32 %v1662, 0.0
      %v1729 = vmax.f32 %v1665, 0.0
      %v1730 = vmax.f32 %v1670, 0.0
      %v1731 = vmax.f32 %v1673, 0.0
      %v1732 = vmax.f32 %v1678, 0.0
      %v1733 = vmax.f32 %v1681, 0.0
      %v1734 = vmax.f32 %v1686, 0.0
      %v1735 = vmax.f32 %v1689, 0.0
      %v1736 = vmax.f32 %v1694, 0.0
      %v1737 = vmax.f32 %v1697, 0.0
      %v1738 = vpack.c.bf16 %v1701, %v1700
      %v1739 = vpack.c.bf16 %v1703, %v1702
      %v1740 = vpack.c.bf16 %v1705, %v1704
      %v1741 = vpack.c.bf16 %v1707, %v1706
      %v1742 = vpack.c.bf16 %v1709, %v1708
      %v1743 = vpack.c.bf16 %v1711, %v1710
      %v1744 = vpack.c.bf16 %v1713, %v1712
      %v1745 = vpack.c.bf16 %v1715, %v1714
      %v1746 = vpack.c.bf16 %v1717, %v1716
      %v1747 = vpack.c.bf16 %v1719, %v1718
      %v1748 = vpack.c.bf16 %v1721, %v1720
      %v1749 = vpack.c.bf16 %v1723, %v1722
      %v1750 = vpack.c.bf16 %v1725, %v1724
      %v1751 = vpack.c.bf16 %v1727, %v1726
      %v1752 = vpack.c.bf16 %v1729, %v1728
      %v1753 = vpack.c.bf16 %v1731, %v1730
      %v1754 = vpack.c.bf16 %v1733, %v1732
      %v1755 = vpack.c.bf16 %v1735, %v1734
      %v1756 = vpack.c.bf16 %v1737, %v1736
      %v1757 = vld [vmem:[%s5] sm:$0xf]
      %v1758 = vld [vmem:[%s5 + $0x4] sm:$0xf]
      %v1759 = vld [vmem:[%s5 + $0x8] sm:$0xf]
      %v1760 = vld [vmem:[%s5 + $0xc] sm:$0xf]
      %v1761 = vld [vmem:[%s5 + $0x10] sm:$0xf]
      %v1762 = vld [vmem:[%s5 + $0x14] sm:$0xf]
      %v1763 = vld [vmem:[%s5 + $0x18] sm:$0xf]
      %v1764 = vld [vmem:[%s5 + $0x1c] sm:$0xf]
      %v1765 = vld [vmem:[%s5 + $0x20] sm:$0xf]
      %v1766 = vld [vmem:[%s5 + $0x24] sm:$0xf]
      %v1767 = vld [vmem:[%s5 + $0x28] sm:$0xf]
      %v1768 = vld [vmem:[%s5 + $0x2c] sm:$0xf]
      %v1769 = vld [vmem:[%s5 + $0x30] sm:$0xf]
      %v1770 = vld [vmem:[%s5 + $0x34] sm:$0xf]
      %v1771 = vld [vmem:[%s5 + $0x38] sm:$0xf]
      %v1772 = vld [vmem:[%s5 + $0x3c] sm:$0xf]
      %v1773 = vld [vmem:[%s7] sm:$0x1]
      %v1775 = vlaneseq
      %v1776 = vshrl.u32 %v1775, 7
      %v1777 = vsub.s32 0, %v1776
      %v1778 = vrot.slane %v1773, %v1777
      %v1796 = vunpack.c.l.b16 %v1757
      %v1797 = vunpack.c.l.b16 %v1758
      %v1798 = vunpack.c.l.b16 %v1759
      %v1799 = vunpack.c.l.b16 %v1760
      %v1800 = vunpack.c.l.b16 %v1761
      %v1801 = vunpack.c.l.b16 %v1762
      %v1802 = vunpack.c.l.b16 %v1763
      %v1803 = vunpack.c.l.b16 %v1764
      %v1804 = vunpack.c.l.b16 %v1765
      %v1805 = vunpack.c.l.b16 %v1766
      %v1806 = vunpack.c.l.b16 %v1767
      %v1807 = vunpack.c.l.b16 %v1768
      %v1808 = vunpack.c.l.b16 %v1769
      %v1809 = vunpack.c.l.b16 %v1770
      %v1810 = vunpack.c.l.b16 %v1771
      %v1811 = vunpack.c.l.b16 %v1772
      %v1812 = vpack.c.b16 %v1797, %v1796
      %v1813 = vpack.c.b16 %v1799, %v1798
      %v1814 = vpack.c.b16 %v1801, %v1800
      %v1815 = vpack.c.b16 %v1803, %v1802
      %v1816 = vpack.c.b16 %v1805, %v1804
      %v1817 = vpack.c.b16 %v1807, %v1806
      %v1818 = vpack.c.b16 %v1809, %v1808
      %v1819 = vpack.c.b16 %v1811, %v1810
      %1828 = vmatprep.subr.bf16.mxu0 0
      %1829 = vmatpush1.bf16.msra.mxu0 %v1819
      %1830 = vmatprep.subr.bf16.mxu0 0
      %1831 = vmatpush1.bf16.msra.mxu0 %v1818
      %1832 = vmatprep.subr.bf16.mxu0 0
      %1833 = vmatpush1.bf16.msra.mxu0 %v1817
      %1834 = vmatprep.subr.bf16.mxu0 0
      %1835 = vmatpush1.bf16.msra.mxu0 %v1816
      %1836 = vmatprep.subr.bf16.mxu0 0
      %1837 = vmatpush1.bf16.msra.mxu0 %v1815
      %1838 = vmatprep.subr.bf16.mxu0 0
      %1839 = vmatpush1.bf16.msra.mxu0 %v1814
      %1840 = vmatprep.subr.bf16.mxu0 0
      %1841 = vmatpush1.bf16.msra.mxu0 %v1813
      %1842 = vmatprep.subr.bf16.mxu0 0
      %1843 = vmatpush1.bf16.msra.mxu0 %v1812
      %1844 = vmatprep.subr.bf16.mxu0 0
      %1845 = vmatpush2.bf16.msra.mxu0 0
      %1846 = vmatprep.subr.bf16.mxu0 0
      %1847 = vmatpush2.bf16.msra.mxu0 0
      %1848 = vmatprep.subr.bf16.mxu0 0
      %1849 = vmatpush2.bf16.msra.mxu0 0
      %1850 = vmatprep.subr.bf16.mxu0 0
      %1851 = vmatpush2.bf16.msra.mxu0 0
      %1852 = vmatprep.subr.bf16.mxu0 0
      %1853 = vmatpush2.bf16.msra.mxu0 0
      %1854 = vmatprep.subr.bf16.mxu0 0
      %1855 = vmatpush2.bf16.msra.mxu0 0
      %1856 = vmatprep.subr.bf16.mxu0 0
      %1857 = vmatpush2.bf16.msra.mxu0 0
      %1858 = vmatprep.subr.bf16.mxu0 0
      %1859 = vmatpush2.bf16.msra.mxu0 0
      %1860 = vmatprep.mubr.bf16.mxu0 0
      %1861 = vmatmul.mubr.bf16.gmra.mxu0 %v1738
      %v1862 = vpop.f32.mrf.mxu0
      %v1863 = vadd.f32 %v1778, %v1862
      %v1864 = vpop.f32.mrf.mxu0
      %v1865 = vpop.f32.mrf.mxu0
      %v1866 = vadd.f32 %v1778, %v1865
      %v1867 = vpop.f32.mrf.mxu0
      %1868 = vmatprep.mubr.bf16.mxu0 0
      %1869 = vmatmul.mubr.bf16.gmra.mxu0 %v1739
      %v1870 = vpop.f32.mrf.mxu0
      %v1871 = vadd.f32 %v1778, %v1870
      %v1872 = vpop.f32.mrf.mxu0
      %v1873 = vpop.f32.mrf.mxu0
      %v1874 = vadd.f32 %v1778, %v1873
      %v1875 = vpop.f32.mrf.mxu0
      %1876 = vmatprep.mubr.bf16.mxu0 0
      %1877 = vmatmul.mubr.bf16.gmra.mxu0 %v1740
      %v1878 = vpop.f32.mrf.mxu0
      %v1879 = vadd.f32 %v1778, %v1878
      %v1880 = vpop.f32.mrf.mxu0
      %v1881 = vpop.f32.mrf.mxu0
      %v1882 = vadd.f32 %v1778, %v1881
      %v1883 = vpop.f32.mrf.mxu0
      %1884 = vmatprep.mubr.bf16.mxu0 0
      %1885 = vmatmul.mubr.bf16.gmra.mxu0 %v1741
      %v1886 = vpop.f32.mrf.mxu0
      %v1887 = vadd.f32 %v1778, %v1886
      %v1888 = vpop.f32.mrf.mxu0
      %v1889 = vpop.f32.mrf.mxu0
      %v1890 = vadd.f32 %v1778, %v1889
      %v1891 = vpop.f32.mrf.mxu0
      %1892 = vmatprep.mubr.bf16.mxu0 0
      %1893 = vmatmul.mubr.bf16.gmra.mxu0 %v1742
      %v1894 = vpop.f32.mrf.mxu0
      %v1895 = vadd.f32 %v1778, %v1894
      %v1896 = vpop.f32.mrf.mxu0
      %v1897 = vpop.f32.mrf.mxu0
      %v1898 = vadd.f32 %v1778, %v1897
      %v1899 = vpop.f32.mrf.mxu0
      %1900 = vmatprep.mubr.bf16.mxu0 0
      %1901 = vmatmul.mubr.bf16.gmra.mxu0 %v1743
      %v1902 = vpop.f32.mrf.mxu0
      %v1903 = vadd.f32 %v1778, %v1902
      %v1904 = vpop.f32.mrf.mxu0
      %v1905 = vpop.f32.mrf.mxu0
      %v1906 = vadd.f32 %v1778, %v1905
      %v1907 = vpop.f32.mrf.mxu0
      %1908 = vmatprep.mubr.bf16.mxu0 0
      %1909 = vmatmul.mubr.bf16.gmra.mxu0 %v1744
      %v1910 = vpop.f32.mrf.mxu0
      %v1911 = vadd.f32 %v1778, %v1910
      %v1912 = vpop.f32.mrf.mxu0
      %v1913 = vpop.f32.mrf.mxu0
      %v1914 = vadd.f32 %v1778, %v1913
      %v1915 = vpop.f32.mrf.mxu0
      %1916 = vmatprep.mubr.bf16.mxu0 0
      %1917 = vmatmul.mubr.bf16.gmra.mxu0 %v1745
      %v1918 = vpop.f32.mrf.mxu0
      %v1919 = vadd.f32 %v1778, %v1918
      %v1920 = vpop.f32.mrf.mxu0
      %v1921 = vpop.f32.mrf.mxu0
      %v1922 = vadd.f32 %v1778, %v1921
      %v1923 = vpop.f32.mrf.mxu0
      %1924 = vmatprep.mubr.bf16.mxu0 0
      %1925 = vmatmul.mubr.bf16.gmra.mxu0 %v1746
      %v1926 = vpop.f32.mrf.mxu0
      %v1927 = vadd.f32 %v1778, %v1926
      %v1928 = vpop.f32.mrf.mxu0
      %v1929 = vpop.f32.mrf.mxu0
      %v1930 = vadd.f32 %v1778, %v1929
      %v1931 = vpop.f32.mrf.mxu0
      %1932 = vmatprep.mubr.bf16.mxu0 0
      %1933 = vmatmul.mubr.bf16.gmra.mxu0 %v1747
      %v1934 = vpop.f32.mrf.mxu0
      %v1935 = vadd.f32 %v1778, %v1934
      %v1936 = vpop.f32.mrf.mxu0
      %v1937 = vpop.f32.mrf.mxu0
      %v1938 = vadd.f32 %v1778, %v1937
      %v1939 = vpop.f32.mrf.mxu0
      %1940 = vmatprep.mubr.bf16.mxu0 0
      %1941 = vmatmul.mubr.bf16.gmra.mxu0 %v1748
      %v1942 = vpop.f32.mrf.mxu0
      %v1943 = vadd.f32 %v1778, %v1942
      %v1944 = vpop.f32.mrf.mxu0
      %v1945 = vpop.f32.mrf.mxu0
      %v1946 = vadd.f32 %v1778, %v1945
      %v1947 = vpop.f32.mrf.mxu0
      %1948 = vmatprep.mubr.bf16.mxu0 0
      %1949 = vmatmul.mubr.bf16.gmra.mxu0 %v1749
      %v1950 = vpop.f32.mrf.mxu0
      %v1951 = vadd.f32 %v1778, %v1950
      %v1952 = vpop.f32.mrf.mxu0
      %v1953 = vpop.f32.mrf.mxu0
      %v1954 = vadd.f32 %v1778, %v1953
      %v1955 = vpop.f32.mrf.mxu0
      %1956 = vmatprep.mubr.bf16.mxu0 0
      %1957 = vmatmul.mubr.bf16.gmra.mxu0 %v1750
      %v1958 = vpop.f32.mrf.mxu0
      %v1959 = vadd.f32 %v1778, %v1958
      %v1960 = vpop.f32.mrf.mxu0
      %v1961 = vpop.f32.mrf.mxu0
      %v1962 = vadd.f32 %v1778, %v1961
      %v1963 = vpop.f32.mrf.mxu0
      %1964 = vmatprep.mubr.bf16.mxu0 0
      %1965 = vmatmul.mubr.bf16.gmra.mxu0 %v1751
      %v1966 = vpop.f32.mrf.mxu0
      %v1967 = vadd.f32 %v1778, %v1966
      %v1968 = vpop.f32.mrf.mxu0
      %v1969 = vpop.f32.mrf.mxu0
      %v1970 = vadd.f32 %v1778, %v1969
      %v1971 = vpop.f32.mrf.mxu0
      %1972 = vmatprep.mubr.bf16.mxu0 0
      %1973 = vmatmul.mubr.bf16.gmra.mxu0 %v1752
      %v1974 = vpop.f32.mrf.mxu0
      %v1975 = vadd.f32 %v1778, %v1974
      %v1976 = vpop.f32.mrf.mxu0
      %v1977 = vpop.f32.mrf.mxu0
      %v1978 = vadd.f32 %v1778, %v1977
      %v1979 = vpop.f32.mrf.mxu0
      %1980 = vmatprep.mubr.bf16.mxu0 0
      %1981 = vmatmul.mubr.bf16.gmra.mxu0 %v1753
      %v1982 = vpop.f32.mrf.mxu0
      %v1983 = vadd.f32 %v1778, %v1982
      %v1984 = vpop.f32.mrf.mxu0
      %v1985 = vpop.f32.mrf.mxu0
      %v1986 = vadd.f32 %v1778, %v1985
      %v1987 = vpop.f32.mrf.mxu0
      %1988 = vmatprep.mubr.bf16.mxu0 0
      %1989 = vmatmul.mubr.bf16.gmra.mxu0 %v1754
      %v1990 = vpop.f32.mrf.mxu0
      %v1991 = vadd.f32 %v1778, %v1990
      %v1992 = vpop.f32.mrf.mxu0
      %v1993 = vpop.f32.mrf.mxu0
      %v1994 = vadd.f32 %v1778, %v1993
      %v1995 = vpop.f32.mrf.mxu0
      %1996 = vmatprep.mubr.bf16.mxu0 0
      %1997 = vmatmul.mubr.bf16.gmra.mxu0 %v1755
      %v1998 = vpop.f32.mrf.mxu0
      %v1999 = vadd.f32 %v1778, %v1998
      %v2000 = vpop.f32.mrf.mxu0
      %v2001 = vpop.f32.mrf.mxu0
      %v2002 = vadd.f32 %v1778, %v2001
      %v2003 = vpop.f32.mrf.mxu0
      %2004 = vmatprep.mubr.bf16.mxu0 0
      %2005 = vmatmul.mubr.bf16.gmra.mxu0 %v1756
      %v2006 = vpop.f32.mrf.mxu0
      %v2007 = vadd.f32 %v1778, %v2006
      %v2008 = vpop.f32.mrf.mxu0
      %v2009 = vpop.f32.mrf.mxu0
      %v2010 = vadd.f32 %v1778, %v2009
      %v2011 = vpop.f32.mrf.mxu0
      %2012 = vdwg.mxu0
      %v2013 = vmul.f32 %v1863, 0.5
      %v2014 = vmul.f32 %v1866, 0.5
      %v2015 = vmul.f32 %v1871, 0.5
      %v2016 = vmul.f32 %v1874, 0.5
      %v2017 = vmul.f32 %v1879, 0.5
      %v2018 = vmul.f32 %v1882, 0.5
      %v2019 = vmul.f32 %v1887, 0.5
      %v2020 = vmul.f32 %v1890, 0.5
      %v2021 = vmul.f32 %v1895, 0.5
      %v2022 = vmul.f32 %v1898, 0.5
      %v2023 = vmul.f32 %v1903, 0.5
      %v2024 = vmul.f32 %v1906, 0.5
      %v2025 = vmul.f32 %v1911, 0.5
      %v2026 = vmul.f32 %v1914, 0.5
      %v2027 = vmul.f32 %v1919, 0.5
      %v2028 = vmul.f32 %v1922, 0.5
      %v2029 = vmul.f32 %v1927, 0.5
      %v2030 = vmul.f32 %v1930, 0.5
      %v2031 = vmul.f32 %v1935, 0.5
      %v2032 = vmul.f32 %v1938, 0.5
      %v2033 = vmul.f32 %v1943, 0.5
      %v2034 = vmul.f32 %v1946, 0.5
      %v2035 = vmul.f32 %v1951, 0.5
      %v2036 = vmul.f32 %v1954, 0.5
      %v2037 = vmul.f32 %v1959, 0.5
      %v2038 = vmul.f32 %v1962, 0.5
      %v2039 = vmul.f32 %v1967, 0.5
      %v2040 = vmul.f32 %v1970, 0.5
      %v2041 = vmul.f32 %v1975, 0.5
      %v2042 = vmul.f32 %v1978, 0.5
      %v2043 = vmul.f32 %v1983, 0.5
      %v2044 = vmul.f32 %v1986, 0.5
      %v2045 = vmul.f32 %v1991, 0.5
      %v2046 = vmul.f32 %v1994, 0.5
      %v2047 = vmul.f32 %v1999, 0.5
      %v2048 = vmul.f32 %v2002, 0.5
      %v2049 = vmul.f32 %v2007, 0.5
      %v2050 = vmul.f32 %v2010, 0.5
      %v2051 = vtanh.pop %v2013
      %v2052 = vtanh.pop %v2014
      %v2053 = vtanh.pop %v2015
      %v2054 = vtanh.pop %v2016
      %v2055 = vtanh.pop %v2017
      %v2056 = vtanh.pop %v2018
      %v2057 = vtanh.pop %v2019
      %v2058 = vtanh.pop %v2020
      %v2059 = vtanh.pop %v2021
      %v2060 = vtanh.pop %v2022
      %v2061 = vtanh.pop %v2023
      %v2062 = vtanh.pop %v2024
      %v2063 = vtanh.pop %v2025
      %v2064 = vtanh.pop %v2026
      %v2065 = vtanh.pop %v2027
      %v2066 = vtanh.pop %v2028
      %v2067 = vtanh.pop %v2029
      %v2068 = vtanh.pop %v2030
      %v2069 = vtanh.pop %v2031
      %v2070 = vtanh.pop %v2032
      %v2071 = vtanh.pop %v2033
      %v2072 = vtanh.pop %v2034
      %v2073 = vtanh.pop %v2035
      %v2074 = vtanh.pop %v2036
      %v2075 = vtanh.pop %v2037
      %v2076 = vtanh.pop %v2038
      %v2077 = vtanh.pop %v2039
      %v2078 = vtanh.pop %v2040
      %v2079 = vtanh.pop %v2041
      %v2080 = vtanh.pop %v2042
      %v2081 = vtanh.pop %v2043
      %v2082 = vtanh.pop %v2044
      %v2083 = vtanh.pop %v2045
      %v2084 = vtanh.pop %v2046
      %v2085 = vtanh.pop %v2047
      %v2086 = vtanh.pop %v2048
      %v2087 = vtanh.pop %v2049
      %v2088 = vtanh.pop %v2050
      %v2089 = vmul.f32 %v2051, 0.5
      %v2090 = vmul.f32 %v2052, 0.5
      %v2091 = vmul.f32 %v2053, 0.5
      %v2092 = vmul.f32 %v2054, 0.5
      %v2093 = vmul.f32 %v2055, 0.5
      %v2094 = vmul.f32 %v2056, 0.5
      %v2095 = vmul.f32 %v2057, 0.5
      %v2096 = vmul.f32 %v2058, 0.5
      %v2097 = vmul.f32 %v2059, 0.5
      %v2098 = vmul.f32 %v2060, 0.5
      %v2099 = vmul.f32 %v2061, 0.5
      %v2100 = vmul.f32 %v2062, 0.5
      %v2101 = vmul.f32 %v2063, 0.5
      %v2102 = vmul.f32 %v2064, 0.5
      %v2103 = vmul.f32 %v2065, 0.5
      %v2104 = vmul.f32 %v2066, 0.5
      %v2105 = vmul.f32 %v2067, 0.5
      %v2106 = vmul.f32 %v2068, 0.5
      %v2107 = vmul.f32 %v2069, 0.5
      %v2108 = vmul.f32 %v2070, 0.5
      %v2109 = vmul.f32 %v2071, 0.5
      %v2110 = vmul.f32 %v2072, 0.5
      %v2111 = vmul.f32 %v2073, 0.5
      %v2112 = vmul.f32 %v2074, 0.5
      %v2113 = vmul.f32 %v2075, 0.5
      %v2114 = vmul.f32 %v2076, 0.5
      %v2115 = vmul.f32 %v2077, 0.5
      %v2116 = vmul.f32 %v2078, 0.5
      %v2117 = vmul.f32 %v2079, 0.5
      %v2118 = vmul.f32 %v2080, 0.5
      %v2119 = vmul.f32 %v2081, 0.5
      %v2120 = vmul.f32 %v2082, 0.5
      %v2121 = vmul.f32 %v2083, 0.5
      %v2122 = vmul.f32 %v2084, 0.5
      %v2123 = vmul.f32 %v2085, 0.5
      %v2124 = vmul.f32 %v2086, 0.5
      %v2125 = vmul.f32 %v2087, 0.5
      %v2126 = vmul.f32 %v2088, 0.5
      %v2127 = vadd.f32 %v2089, 0.5
      %v2128 = vadd.f32 %v2090, 0.5
      %v2129 = vadd.f32 %v2091, 0.5
      %v2130 = vadd.f32 %v2092, 0.5
      %v2131 = vadd.f32 %v2093, 0.5
      %v2132 = vadd.f32 %v2094, 0.5
      %v2133 = vadd.f32 %v2095, 0.5
      %v2134 = vadd.f32 %v2096, 0.5
      %v2135 = vadd.f32 %v2097, 0.5
      %v2136 = vadd.f32 %v2098, 0.5
      %v2137 = vadd.f32 %v2099, 0.5
      %v2138 = vadd.f32 %v2100, 0.5
      %v2139 = vadd.f32 %v2101, 0.5
      %v2140 = vadd.f32 %v2102, 0.5
      %v2141 = vadd.f32 %v2103, 0.5
      %v2142 = vadd.f32 %v2104, 0.5
      %v2143 = vadd.f32 %v2105, 0.5
      %v2144 = vadd.f32 %v2106, 0.5
      %v2145 = vadd.f32 %v2107, 0.5
      %v2146 = vadd.f32 %v2108, 0.5
      %v2147 = vadd.f32 %v2109, 0.5
      %v2148 = vadd.f32 %v2110, 0.5
      %v2149 = vadd.f32 %v2111, 0.5
      %v2150 = vadd.f32 %v2112, 0.5
      %v2151 = vadd.f32 %v2113, 0.5
      %v2152 = vadd.f32 %v2114, 0.5
      %v2153 = vadd.f32 %v2115, 0.5
      %v2154 = vadd.f32 %v2116, 0.5
      %v2155 = vadd.f32 %v2117, 0.5
      %v2156 = vadd.f32 %v2118, 0.5
      %v2157 = vadd.f32 %v2119, 0.5
      %v2158 = vadd.f32 %v2120, 0.5
      %v2159 = vadd.f32 %v2121, 0.5
      %v2160 = vadd.f32 %v2122, 0.5
      %v2161 = vadd.f32 %v2123, 0.5
      %v2162 = vadd.f32 %v2124, 0.5
      %v2163 = vadd.f32 %v2125, 0.5
      %v2164 = vadd.f32 %v2126, 0.5
      %2165 = vst [vmem:[%s307] sm:$0xff] %v2127
      %2166 = vst [vmem:[%s307 + $0x8] sm:$0xff] %v2128
      %2167 = vst [vmem:[%s307 + $0x10] sm:$0xff] %v2129
      %2168 = vst [vmem:[%s307 + $0x18] sm:$0xff] %v2130
      %2169 = vst [vmem:[%s307 + $0x20] sm:$0xff] %v2131
      %2170 = vst [vmem:[%s307 + $0x28] sm:$0xff] %v2132
      %2171 = vst [vmem:[%s307 + $0x30] sm:$0xff] %v2133
      %2172 = vst [vmem:[%s307 + $0x38] sm:$0xff] %v2134
      %2173 = vst [vmem:[%s307 + $0x40] sm:$0xff] %v2135
      %2174 = vst [vmem:[%s307 + $0x48] sm:$0xff] %v2136
      %2175 = vst [vmem:[%s307 + $0x50] sm:$0xff] %v2137
      %2176 = vst [vmem:[%s307 + $0x58] sm:$0xff] %v2138
      %2177 = vst [vmem:[%s307 + $0x60] sm:$0xff] %v2139
      %2178 = vst [vmem:[%s307 + $0x68] sm:$0xff] %v2140
      %2179 = vst [vmem:[%s307 + $0x70] sm:$0xff] %v2141
      %2180 = vst [vmem:[%s307 + $0x78] sm:$0xff] %v2142
      %2181 = vst [vmem:[%s307 + $0x80] sm:$0xff] %v2143
      %2182 = vst [vmem:[%s307 + $0x88] sm:$0xff] %v2144
      %2183 = vst [vmem:[%s307 + $0x90] sm:$0xff] %v2145
      %2184 = vst [vmem:[%s307 + $0x98] sm:$0xff] %v2146
      %2185 = vst [vmem:[%s307 + $0xa0] sm:$0xff] %v2147
      %2186 = vst [vmem:[%s307 + $0xa8] sm:$0xff] %v2148
      %2187 = vst [vmem:[%s307 + $0xb0] sm:$0xff] %v2149
      %2188 = vst [vmem:[%s307 + $0xb8] sm:$0xff] %v2150
      %2189 = vst [vmem:[%s307 + $0xc0] sm:$0xff] %v2151
      %2190 = vst [vmem:[%s307 + $0xc8] sm:$0xff] %v2152
      %2191 = vst [vmem:[%s307 + $0xd0] sm:$0xff] %v2153
      %2192 = vst [vmem:[%s307 + $0xd8] sm:$0xff] %v2154
      %2193 = vst [vmem:[%s307 + $0xe0] sm:$0xff] %v2155
      %2194 = vst [vmem:[%s307 + $0xe8] sm:$0xff] %v2156
      %2195 = vst [vmem:[%s307 + $0xf0] sm:$0xff] %v2157
      %2196 = vst [vmem:[%s307 + $0xf8] sm:$0xff] %v2158
      %2197 = vst [vmem:[%s307 + $0x100] sm:$0xff] %v2159
      %2198 = vst [vmem:[%s307 + $0x108] sm:$0xff] %v2160
      %2199 = vst [vmem:[%s307 + $0x110] sm:$0xff] %v2161
      %2200 = vst [vmem:[%s307 + $0x118] sm:$0xff] %v2162
      %2201 = vst [vmem:[%s307 + $0x120] sm:$0xff] %v2163
      %2202 = vst [vmem:[%s307 + $0x128] sm:$0xff] %v2164
      %s2203 = smul.u32 38, %s19
      %p2204 = scmp.lt.s32.totalorder %s2203, 75
      %s2205 = scalar_select %p2204, %s2203, 75
      %s2206 = smul.addr %s2205, 8
      %s2207 = scalar_lea.vmem %s8, %s2206
      // Predicated region
      $region53: #{autoencoder_forward.1} parent=51 // pred_check
        %p2208 = pneg %p210
      $region54: #{autoencoder_forward.1} parent=51 // pred_check_branch
        %2210 = sbr.rel (%p2208) target = $region56
      $region55: #{autoencoder_forward.1} parent=51 // pred_region
        %s2211 = smul.u32 38, %s19
      $region56: #{autoencoder_forward.1} parent=51 // pred_fallthru
        _
    $region52: #{autoencoder_forward.1} parent=5 // pred_fallthru
      _
    %p2212 = scmp.le.s32.totalorder 2, %s14
    // Predicated region
    $region57: #{autoencoder_forward.1} parent=5 // pred_check
      %p2213 = pneg %p2212
    $region58: #{autoencoder_forward.1} parent=5 // pred_check_branch
      %2215 = sbr.rel (%p2213) target = $region60
    $region59: #{autoencoder_forward.1} parent=5 // pred_region
      %s2216 = ssub.s32 %s14, 2
      // Predicated region
      $region61: #{autoencoder_forward.1} parent=59 // pred_check
        %p2217 = pneg %p216
      $region62: #{autoencoder_forward.1} parent=59 // pred_check_branch
        %2219 = sbr.rel (%p2217) target = $region64
      $region63: #{autoencoder_forward.1} parent=59 // pred_region
        %s2220 = smul.u32 38, %s20
        %p2221 = scmp.lt.s32.totalorder %s2220, 75
        %s2222 = scalar_select %p2221, %s2220, 75
        %s2223 = smul.addr %s2222, 8
        %s2224 = scalar_lea.vmem %s8, %s2223
      $region64: #{autoencoder_forward.1} parent=59 // pred_fallthru
        _
    $region60: #{autoencoder_forward.1} parent=5 // pred_fallthru
      _
  $region6: #{autoencoder_forward.1} parent=0 // loop_footer
    %s18 = sadd.s32 1, %s14
  $region7: #{autoencoder_forward.1} parent=0 // loop_footer_branch
    %13 = sbr.rel target = $region3
  $region8: #{autoencoder_forward.1} parent=0 // loop_exit
    _

</llo_original>
